<compile_context>
chip_gen: v7x
topology: tpu7x:2x2x1
jax: 0.10.0
libtpu: 0.0.40
codegen_flags: <defaults>
</compile_context>

<pallas_src>
from functools import partial

import jax
import jax.numpy as jnp
from jax import lax
from jax.experimental import pallas as pl
from jax.experimental.pallas import tpu as pltpu


# ----------------------------------------------------------------------------
# Fused kernel: conv1+BN+ReLU -> conv2+BN+ReLU -> 2x2 maxpool, NCHW in/out.
# ----------------------------------------------------------------------------
def _encoder_kernel(block_n, H, W, Cin, Cout, out_dtype,
                    x_ref, wt1_ref, wt2_ref, sb1_ref, sb2_ref, sel_ref,
                    feat_ref, pool_ref, lhs1_ref, lhs2_ref):
    # x_ref:   (block_n, Cin, H, W)        f32   NCHW input block
    # wt1_ref: (3*Cin*W,  Cout*W)          bf16  conv1 banded weights (K-concat)
    # wt2_ref: (3*Cout*W, Cout*W)          bf16  conv2 banded weights (K-concat)
    # sb1_ref: (2, Cout*W)                 f32   row0 = BN1 scale, row1 = bias
    # sb2_ref: (2, Cout*W)                 f32   row0 = BN2 scale, row1 = bias
    # sel_ref: (2, Cout*W, Cout*(W//2))    f32   even/odd column selectors
    # feat_ref:(block_n, Cout, H, W)       NCHW conv-block output
    # pool_ref:(block_n, Cout, H/2, W/2)   NCHW pooled output
    # lhs1_ref:(block_n*H, 3*Cin*W)        bf16  conv1 LHS scratch
    # lhs2_ref:(block_n*H, 3*Cout*W)       bf16  conv2 LHS scratch
    f32, bf16 = jnp.float32, jnp.bfloat16
    K1, K2 = Cin * W, Cout * W
    Hh, Wh = H // 2, W // 2

    # 0/1 row-shift matrices (built from a 2D iota, hoisted out of the loops).
    # (sdn @ X)[h] = X[h-1] with row 0 -> 0 ; (sup @ X)[h] = X[h+1], row H-1 -> 0.
    # They implement the dy = 0 / 2 taps (incl. the zero height halo) on the
    # MXU, so all scratch stores below are full-height and aligned.
    row = lax.broadcasted_iota(jnp.int32, (H, H), 0)
    col = lax.broadcasted_iota(jnp.int32, (H, H), 1)
    sdn = (col == row - 1).astype(bf16)
    sup = (col == row + 1).astype(bf16)

    # ---- conv1 LHS: NCHW -> banded, channel-major (ci*W+xi), K-concat over dy
    for nb in range(block_n):
        r0 = nb * H
        for ci in range(Cin):
            # one f32->bf16 cast per input element, aligned full-height store
            lhs1_ref[r0:r0 + H, K1 + ci * W:K1 + (ci + 1) * W] = \
                x_ref[nb, ci].astype(bf16)
        ctr = lhs1_ref[r0:r0 + H, K1:2 * K1]                    # dy = 1 tap
        lhs1_ref[r0:r0 + H, 0:K1] = jnp.dot(                    # dy = 0 tap
            sdn, ctr, preferred_element_type=f32).astype(bf16)
        lhs1_ref[r0:r0 + H, 2 * K1:3 * K1] = jnp.dot(           # dy = 2 tap
            sup, ctr, preferred_element_type=f32).astype(bf16)

    # ---- conv1 + BN1 + ReLU: ONE MXU matmul, M = block_n*H, K = 3*W*Cin ----
    acc1 = jnp.dot(lhs1_ref[...], wt1_ref[...], preferred_element_type=f32)
    y1 = jnp.maximum(acc1 * sb1_ref[0:1, :] + sb1_ref[1:2, :], 0.0)
    y1b = y1.astype(bf16)               # single cast of the conv1 activation

    # ---- conv2 LHS (the activation never leaves VMEM) ----
    for nb in range(block_n):
        r0 = nb * H
        blk = y1b[r0:r0 + H]
        lhs2_ref[r0:r0 + H, K2:2 * K2] = blk
        lhs2_ref[r0:r0 + H, 0:K2] = jnp.dot(
            sdn, blk, preferred_element_type=f32).astype(bf16)
        lhs2_ref[r0:r0 + H, 2 * K2:3 * K2] = jnp.dot(
            sup, blk, preferred_element_type=f32).astype(bf16)

    # ---- conv2 + BN2 + ReLU: ONE MXU matmul, K = 3*W*Cout ----
    acc2 = jnp.dot(lhs2_ref[...], wt2_ref[...], preferred_element_type=f32)
    y2 = jnp.maximum(acc2 * sb2_ref[0:1, :] + sb2_ref[1:2, :], 0.0)

    # ---- feature output written straight back in NCHW (no wrapper transpose)
    for nb in range(block_n):
        for co in range(Cout):
            feat_ref[nb, co] = y2[nb * H:(nb + 1) * H,
                                  co * W:(co + 1) * W].astype(out_dtype)

    # ---- fused 2x2 max-pool, entirely in VMEM ----
    # Row pairs: leading-dim reshape + max (H even, so pairs never cross items)
    vh = jnp.max(y2.reshape(block_n * Hh, 2, K2), axis=1)       # (bn*Hh, Cout*W)
    # Column pairs: exact 0/1 selection matmuls then elementwise max.
    pe = jnp.dot(vh, sel_ref[0], preferred_element_type=f32,
                 precision=lax.Precision.HIGHEST)
    po = jnp.dot(vh, sel_ref[1], preferred_element_type=f32,
                 precision=lax.Precision.HIGHEST)
    pcw = jnp.maximum(pe, po)                                    # (bn*Hh, Cout*Wh)
    for nb in range(block_n):
        for co in range(Cout):
            pool_ref[nb, co] = pcw[nb * Hh:(nb + 1) * Hh,
                                   co * Wh:(co + 1) * Wh].astype(out_dtype)


# ----------------------------------------------------------------------------
# Wrapper-side parameter plumbing (tiny, runs once per call; touches weights
# only — the activations are never transposed/copied outside the kernel).
# ----------------------------------------------------------------------------
def _toeplitz_cw(w_hwio, W):
    """3x3 HWIO conv weights -> K-concatenated banded matrix.

    Returns wt of shape (3*Cin*W, Cout*W) with
      wt[dy*Cin*W + ci*W + xi, co*W + xo] = w[dy, xi-xo+1, ci, co]
    (zero when |xi-xo| > 1), i.e. LHS columns are channel-major (NCHW order)
    and SAME zero padding along W is folded into the band structure.
    """
    kH, kW, Cin, Cout = w_hwio.shape
    xi = jnp.arange(W)[:, None]
    xo = jnp.arange(W)[None, :]
    band = jnp.stack([(xi == xo + dx - (kW // 2)).astype(w_hwio.dtype)
                      for dx in range(kW)], axis=0)       # (kW, W, W) [dx, xi, xo]
    wt = jnp.einsum("dio,kdcu->kciuo", band, w_hwio)      # (kH, Cin, W, Cout, W)
    return wt.reshape(kH * Cin * W, Cout * W)


def _pool_selectors(W, Cout):
    """0/1 matrices selecting even / odd width positions per channel band."""
    Wh = W // 2
    j = jnp.arange(Cout * W)                  # input col  = co * W  + x
    m = jnp.arange(Cout * Wh)                 # output col = co * Wh + k
    co_j, x_j = j // W, j % W
    co_m, k_m = m // Wh, m % Wh
    same = co_j[:, None] == co_m[None, :]
    even = same & (x_j[:, None] == 2 * k_m[None, :])
    odd = same & (x_j[:, None] == 2 * k_m[None, :] + 1)
    return jnp.stack([even, odd]).astype(jnp.float32)     # (2, Cout*W, Cout*Wh)


def _pick_block_n(N, H):
    """Images per grid step: fill the MXU M dim (~256 rows) but keep >= 2
    grid steps when possible so both v7x TensorCores get work."""
    target = max(1, 256 // H)
    bn = max(1, min(target, N if N < 2 else N // 2))
    while N % bn:
        bn -= 1
    return bn


# ----------------------------------------------------------------------------
# Encoder forward (NCHW in, (NCHW, NCHW) out) — matches the PyTorch module
# ----------------------------------------------------------------------------
def encoder_forward(x_nchw, params, *, block_n=None, out_dtype=jnp.float32):
    N, Cin, H, W = x_nchw.shape
    Cout = params["w1"].shape[-1]
    assert H % 2 == 0 and W % 2 == 0, "MaxPool2d(2) needs even H, W"
    Hh, Wh = H // 2, W // 2

    if block_n is None:
        block_n = _pick_block_n(N, H)
    assert N % block_n == 0

    # bf16 for MXU operands; BN scale/bias stay f32.
    wt1 = _toeplitz_cw(params["w1"], W).astype(jnp.bfloat16)   # (3*Cin*W,  Cout*W)
    wt2 = _toeplitz_cw(params["w2"], W).astype(jnp.bfloat16)   # (3*Cout*W, Cout*W)
    sb1 = jnp.stack([jnp.repeat(params["s1"], W), jnp.repeat(params["b1"], W)])
    sb2 = jnp.stack([jnp.repeat(params["s2"], W), jnp.repeat(params["b2"], W)])
    sel = _pool_selectors(W, Cout)                             # (2, Cout*W, Cout*Wh)

    out_size = jnp.dtype(out_dtype).itemsize
    flops = (2 * N * H * W * 9 * (Cin * Cout + Cout * Cout)
             + 2 * 2 * N * Hh * (Cout * W) * (Cout * Wh))
    bytes_accessed = int(x_nchw.size * x_nchw.dtype.itemsize
                         + wt1.size * 2 + wt2.size * 2
                         + sb1.size * 4 + sb2.size * 4 + sel.size * 4
                         + N * Cout * H * W * out_size
                         + N * Cout * Hh * Wh * out_size)

    feat, pool = pl.pallas_call(
        partial(_encoder_kernel, block_n, H, W, Cin, Cout, out_dtype),
        out_shape=(jax.ShapeDtypeStruct((N, Cout, H, W), out_dtype),
                   jax.ShapeDtypeStruct((N, Cout, Hh, Wh), out_dtype)),
        grid_spec=pltpu.PrefetchScalarGridSpec(
            num_scalar_prefetch=0,
            grid=(N // block_n,),
            in_specs=[
                pl.BlockSpec((block_n, Cin, H, W), lambda n: (n, 0, 0, 0)),
                pl.BlockSpec((3 * Cin * W, Cout * W), lambda n: (0, 0)),
                pl.BlockSpec((3 * Cout * W, Cout * W), lambda n: (0, 0)),
                pl.BlockSpec((2, Cout * W), lambda n: (0, 0)),
                pl.BlockSpec((2, Cout * W), lambda n: (0, 0)),
                pl.BlockSpec((2, Cout * W, Cout * Wh), lambda n: (0, 0, 0)),
            ],
            out_specs=[
                pl.BlockSpec((block_n, Cout, H, W), lambda n: (n, 0, 0, 0)),
                pl.BlockSpec((block_n, Cout, Hh, Wh), lambda n: (n, 0, 0, 0)),
            ],
            scratch_shapes=[
                pltpu.VMEM((block_n * H, 3 * Cin * W), jnp.bfloat16),
                pltpu.VMEM((block_n * H, 3 * Cout * W), jnp.bfloat16),
            ],
        ),
        compiler_params=pltpu.CompilerParams(
            dimension_semantics=("parallel",)),
        cost_estimate=pl.CostEstimate(flops=flops, transcendentals=0,
                                      bytes_accessed=bytes_accessed),
    )(x_nchw, wt1, wt2, sb1, sb2, sel)
    return feat, pool


# ----------------------------------------------------------------------------
# Deterministic synthetic parameters + inference-mode BN folding
# ----------------------------------------------------------------------------
def make_convblock_params(key, in_channels, out_channels, eps=1e-5):
    ks = jax.random.split(key, 10)

    def conv_w(k, cin, cout):
        # PyTorch layout (Cout, Cin, 3, 3) -> HWIO (3, 3, Cin, Cout)
        w_oihw = jax.random.normal(k, (cout, cin, 3, 3), jnp.float32) * 0.1
        return jnp.transpose(w_oihw, (2, 3, 1, 0))

    def bn_fold(kg, kb, km, kv, c):
        gamma = 1.0 + 0.1 * jax.random.normal(kg, (c,), jnp.float32)
        beta = 0.1 * jax.random.normal(kb, (c,), jnp.float32)
        mean = 0.1 * jax.random.normal(km, (c,), jnp.float32)
        var = 1.0 + 0.1 * jnp.abs(jax.random.normal(kv, (c,), jnp.float32))
        scale = gamma / jnp.sqrt(var + eps)
        bias = beta - mean * scale
        return scale, bias

    w1 = conv_w(ks[0], in_channels, out_channels)
    s1, b1 = bn_fold(ks[1], ks[2], ks[3], ks[4], out_channels)
    w2 = conv_w(ks[5], out_channels, out_channels)
    s2, b2 = bn_fold(ks[6], ks[7], ks[8], ks[9], out_channels)
    return dict(w1=w1, s1=s1, b1=b1, w2=w2, s2=s2, b2=b2)


# ----------------------------------------------------------------------------
# Pure-JAX reference (emulates the kernel's bf16 operand rounding)
# ----------------------------------------------------------------------------
def encoder_reference(x_nchw, params):
    bf = lambda t: t.astype(jnp.bfloat16).astype(jnp.float32)
    x = jnp.transpose(x_nchw, (0, 2, 3, 1))

    def block(h, w, s, b):
        y = lax.conv_general_dilated(
            bf(h), bf(w), window_strides=(1, 1), padding="SAME",
            dimension_numbers=("NHWC", "HWIO", "NHWC"))
        return jnp.maximum(y * s + b, 0.0)

    h1 = block(x, params["w1"], params["s1"], params["b1"])
    h2 = block(h1, params["w2"], params["s2"], params["b2"])
    N, H, W, C = h2.shape
    p = jnp.max(h2.reshape(N, H // 2, 2, W // 2, 2, C), axis=(2, 4))
    return jnp.transpose(h2, (0, 3, 1, 2)), jnp.transpose(p, (0, 3, 1, 2))


if __name__ == "__main__":
    N, Cin, Cout, H, W = 2, 4, 8, 16, 16
    key = jax.random.PRNGKey(0)
    kx, kp = jax.random.split(key)
    x = jax.random.normal(kx, (N, Cin, H, W), jnp.float32)
    params = make_convblock_params(kp, Cin, Cout)

    feat, pooled = jax.jit(encoder_forward)(x, params)
    jax.block_until_ready((feat, pooled))

    ref_feat, ref_pool = encoder_reference(x, params)
    assert feat.shape == (N, Cout, H, W)
    assert pooled.shape == (N, Cout, H // 2, W // 2)
    assert jnp.allclose(feat, ref_feat, atol=1e-2, rtol=1e-2)
    assert jnp.allclose(pooled, ref_pool, atol=1e-2, rtol=1e-2)

    print("KERNEL_OK")
</pallas_src>

<mosaic_0001>
module attributes {stable_mosaic.version = 11 : i64} {
  func.func @_encoder_kernel(%arg0: i32, %arg1: memref<1x4x16x16xf32, #tpu.memory_space<vmem>>, %arg2: memref<192x128xbf16, #tpu.memory_space<vmem>>, %arg3: memref<384x128xbf16, #tpu.memory_space<vmem>>, %arg4: memref<2x128xf32, #tpu.memory_space<vmem>>, %arg5: memref<2x128xf32, #tpu.memory_space<vmem>>, %arg6: memref<2x128x64xf32, #tpu.memory_space<vmem>>, %arg7: memref<1x8x16x16xf32, #tpu.memory_space<vmem>>, %arg8: memref<1x8x8x8xf32, #tpu.memory_space<vmem>>, %arg9: memref<16x192xbf16, #tpu.memory_space<vmem>>, %arg10: memref<16x384xbf16, #tpu.memory_space<vmem>>) attributes {dimension_semantics = [#tpu.dimension_semantics<parallel>], iteration_bounds = array<i64: 2>, scalar_prefetch = 0 : i64, scratch_operands = 2 : i64, tpu.core_type = #tpu.core_type<tc>, window_params = [{transform_indices = @transform_0, window_bounds = array<i64: 1, 4, 16, 16>}, {pipeline_mode = #tpu.pipeline_mode<synchronous>, transform_indices = @transform_1, window_bounds = array<i64: 192, 128>}, {pipeline_mode = #tpu.pipeline_mode<synchronous>, transform_indices = @transform_2, window_bounds = array<i64: 384, 128>}, {pipeline_mode = #tpu.pipeline_mode<synchronous>, transform_indices = @transform_3, window_bounds = array<i64: 2, 128>}, {pipeline_mode = #tpu.pipeline_mode<synchronous>, transform_indices = @transform_4, window_bounds = array<i64: 2, 128>}, {pipeline_mode = #tpu.pipeline_mode<synchronous>, transform_indices = @transform_5, window_bounds = array<i64: 2, 128, 64>}, {transform_indices = @transform_6, window_bounds = array<i64: 1, 8, 16, 16>}, {transform_indices = @transform_7, window_bounds = array<i64: 1, 8, 8, 8>}]} {
    %0 = tpu.iota {dimensions = array<i32: 0>} : vector<16x16xi32>
    %1 = tpu.iota {dimensions = array<i32: 1>} : vector<16x16xi32>
    %c1_i32 = arith.constant 1 : i32
    %2 = vector.broadcast %c1_i32 : i32 to vector<16x16xi32>
    %3 = arith.subi %0, %2 : vector<16x16xi32>
    %4 = arith.cmpi eq, %1, %3 : vector<16x16xi32>
    %5 = arith.extui %4 : vector<16x16xi1> to vector<16x16xi32>
    %6 = arith.sitofp %5 : vector<16x16xi32> to vector<16x16xf32>
    %7 = arith.truncf %6 : vector<16x16xf32> to vector<16x16xbf16>
    %c1_i32_0 = arith.constant 1 : i32
    %8 = vector.broadcast %c1_i32_0 : i32 to vector<16x16xi32>
    %9 = arith.addi %0, %8 : vector<16x16xi32>
    %10 = arith.cmpi eq, %1, %9 : vector<16x16xi32>
    %11 = arith.extui %10 : vector<16x16xi1> to vector<16x16xi32>
    %12 = arith.sitofp %11 : vector<16x16xi32> to vector<16x16xf32>
    %13 = arith.truncf %12 : vector<16x16xf32> to vector<16x16xbf16>
    %c0 = arith.constant 0 : index
    %c0_1 = arith.constant 0 : index
    %c0_2 = arith.constant 0 : index
    %c0_3 = arith.constant 0 : index
    %14 = vector.load %arg1[%c0, %c0_1, %c0_2, %c0_3] : memref<1x4x16x16xf32, #tpu.memory_space<vmem>>, vector<1x1x16x16xf32>
    %15 = vector.shape_cast %14 : vector<1x1x16x16xf32> to vector<16x16xf32>
    %16 = arith.truncf %15 : vector<16x16xf32> to vector<16x16xbf16>
    %c0_4 = arith.constant 0 : index
    %c64 = arith.constant 64 : index
    %17 = vector.load %arg9[%c0_4, %c64] : memref<16x192xbf16, #tpu.memory_space<vmem>>, vector<16x16xbf16>
    tpu.vector_store %arg9[%c0_4, %c64], %16 {strides = array<i32>} : memref<16x192xbf16, #tpu.memory_space<vmem>>, vector<16x16xbf16>,
    %c0_5 = arith.constant 0 : index
    %c1 = arith.constant 1 : index
    %c0_6 = arith.constant 0 : index
    %c0_7 = arith.constant 0 : index
    %18 = vector.load %arg1[%c0_5, %c1, %c0_6, %c0_7] : memref<1x4x16x16xf32, #tpu.memory_space<vmem>>, vector<1x1x16x16xf32>
    %19 = vector.shape_cast %18 : vector<1x1x16x16xf32> to vector<16x16xf32>
    %20 = arith.truncf %19 : vector<16x16xf32> to vector<16x16xbf16>
    %c0_8 = arith.constant 0 : index
    %c80 = arith.constant 80 : index
    %21 = vector.load %arg9[%c0_8, %c80] : memref<16x192xbf16, #tpu.memory_space<vmem>>, vector<16x16xbf16>
    tpu.vector_store %arg9[%c0_8, %c80], %20 {strides = array<i32>} : memref<16x192xbf16, #tpu.memory_space<vmem>>, vector<16x16xbf16>,
    %c0_9 = arith.constant 0 : index
    %c2 = arith.constant 2 : index
    %c0_10 = arith.constant 0 : index
    %c0_11 = arith.constant 0 : index
    %22 = vector.load %arg1[%c0_9, %c2, %c0_10, %c0_11] : memref<1x4x16x16xf32, #tpu.memory_space<vmem>>, vector<1x1x16x16xf32>
    %23 = vector.shape_cast %22 : vector<1x1x16x16xf32> to vector<16x16xf32>
    %24 = arith.truncf %23 : vector<16x16xf32> to vector<16x16xbf16>
    %c0_12 = arith.constant 0 : index
    %c96 = arith.constant 96 : index
    %25 = vector.load %arg9[%c0_12, %c96] : memref<16x192xbf16, #tpu.memory_space<vmem>>, vector<16x16xbf16>
    tpu.vector_store %arg9[%c0_12, %c96], %24 {strides = array<i32>} : memref<16x192xbf16, #tpu.memory_space<vmem>>, vector<16x16xbf16>,
    %c0_13 = arith.constant 0 : index
    %c3 = arith.constant 3 : index
    %c0_14 = arith.constant 0 : index
    %c0_15 = arith.constant 0 : index
    %26 = vector.load %arg1[%c0_13, %c3, %c0_14, %c0_15] : memref<1x4x16x16xf32, #tpu.memory_space<vmem>>, vector<1x1x16x16xf32>
    %27 = vector.shape_cast %26 : vector<1x1x16x16xf32> to vector<16x16xf32>
    %28 = arith.truncf %27 : vector<16x16xf32> to vector<16x16xbf16>
    %c0_16 = arith.constant 0 : index
    %c112 = arith.constant 112 : index
    %29 = vector.load %arg9[%c0_16, %c112] : memref<16x192xbf16, #tpu.memory_space<vmem>>, vector<16x16xbf16>
    tpu.vector_store %arg9[%c0_16, %c112], %28 {strides = array<i32>} : memref<16x192xbf16, #tpu.memory_space<vmem>>, vector<16x16xbf16>,
    %c0_17 = arith.constant 0 : index
    %c64_18 = arith.constant 64 : index
    %30 = vector.load %arg9[%c0_17, %c64_18] : memref<16x192xbf16, #tpu.memory_space<vmem>>, vector<16x64xbf16>
    %cst = arith.constant dense<0.000000e+00> : vector<16x64xf32>
    %31 = tpu.matmul %7, %30, %cst {dimension_numbers = #tpu.dot_dimension_numbers<[1], [0], [0], [1], [0, 0, 1, 1], [], []>} : vector<16x16xbf16>, vector<16x64xbf16>, vector<16x64xf32> -> vector<16x64xf32>
    %32 = arith.truncf %31 : vector<16x64xf32> to vector<16x64xbf16>
    %c0_19 = arith.constant 0 : index
    %c0_20 = arith.constant 0 : index
    %33 = vector.load %arg9[%c0_19, %c0_20] : memref<16x192xbf16, #tpu.memory_space<vmem>>, vector<16x64xbf16>
    tpu.vector_store %arg9[%c0_19, %c0_20], %32 {strides = array<i32>} : memref<16x192xbf16, #tpu.memory_space<vmem>>, vector<16x64xbf16>,
    %cst_21 = arith.constant dense<0.000000e+00> : vector<16x64xf32>
    %34 = tpu.matmul %13, %30, %cst_21 {dimension_numbers = #tpu.dot_dimension_numbers<[1], [0], [0], [1], [0, 0, 1, 1], [], []>} : vector<16x16xbf16>, vector<16x64xbf16>, vector<16x64xf32> -> vector<16x64xf32>
    %35 = arith.truncf %34 : vector<16x64xf32> to vector<16x64xbf16>
    %c0_22 = arith.constant 0 : index
    %c128 = arith.constant 128 : index
    %36 = vector.load %arg9[%c0_22, %c128] : memref<16x192xbf16, #tpu.memory_space<vmem>>, vector<16x64xbf16>
    tpu.vector_store %arg9[%c0_22, %c128], %35 {strides = array<i32>} : memref<16x192xbf16, #tpu.memory_space<vmem>>, vector<16x64xbf16>,
    %c0_23 = arith.constant 0 : index
    %c0_24 = arith.constant 0 : index
    %37 = vector.load %arg9[%c0_23, %c0_24] : memref<16x192xbf16, #tpu.memory_space<vmem>>, vector<16x192xbf16>
    %c0_25 = arith.constant 0 : index
    %c0_26 = arith.constant 0 : index
    %38 = vector.load %arg2[%c0_25, %c0_26] : memref<192x128xbf16, #tpu.memory_space<vmem>>, vector<192x128xbf16>
    %cst_27 = arith.constant dense<0.000000e+00> : vector<16x128xf32>
    %39 = tpu.matmul %37, %38, %cst_27 {dimension_numbers = #tpu.dot_dimension_numbers<[1], [0], [0], [1], [0, 0, 1, 1], [], []>} : vector<16x192xbf16>, vector<192x128xbf16>, vector<16x128xf32> -> vector<16x128xf32>
    %c0_28 = arith.constant 0 : index
    %c0_29 = arith.constant 0 : index
    %40 = vector.load %arg4[%c0_28, %c0_29] : memref<2x128xf32, #tpu.memory_space<vmem>>, vector<1x128xf32>
    %41 = vector.broadcast %40 : vector<1x128xf32> to vector<16x128xf32>
    %42 = arith.mulf %39, %41 : vector<16x128xf32>
    %c1_30 = arith.constant 1 : index
    %c0_31 = arith.constant 0 : index
    %43 = vector.load %arg4[%c1_30, %c0_31] : memref<2x128xf32, #tpu.memory_space<vmem>>, vector<1x128xf32>
    %44 = vector.broadcast %43 : vector<1x128xf32> to vector<16x128xf32>
    %45 = arith.addf %42, %44 : vector<16x128xf32>
    %cst_32 = arith.constant 0.000000e+00 : f32
    %46 = vector.broadcast %cst_32 : f32 to vector<16x128xf32>
    %47 = arith.maximumf %45, %46 : vector<16x128xf32>
    %48 = arith.truncf %47 : vector<16x128xf32> to vector<16x128xbf16>
    %c0_33 = arith.constant 0 : index
    %c128_34 = arith.constant 128 : index
    %49 = vector.load %arg10[%c0_33, %c128_34] : memref<16x384xbf16, #tpu.memory_space<vmem>>, vector<16x128xbf16>
    tpu.vector_store %arg10[%c0_33, %c128_34], %48 {strides = array<i32>} : memref<16x384xbf16, #tpu.memory_space<vmem>>, vector<16x128xbf16>,
    %cst_35 = arith.constant dense<0.000000e+00> : vector<16x128xf32>
    %50 = tpu.matmul %7, %48, %cst_35 {dimension_numbers = #tpu.dot_dimension_numbers<[1], [0], [0], [1], [0, 0, 1, 1], [], []>} : vector<16x16xbf16>, vector<16x128xbf16>, vector<16x128xf32> -> vector<16x128xf32>
    %51 = arith.truncf %50 : vector<16x128xf32> to vector<16x128xbf16>
    %c0_36 = arith.constant 0 : index
    %c0_37 = arith.constant 0 : index
    %52 = vector.load %arg10[%c0_36, %c0_37] : memref<16x384xbf16, #tpu.memory_space<vmem>>, vector<16x128xbf16>
    tpu.vector_store %arg10[%c0_36, %c0_37], %51 {strides = array<i32>} : memref<16x384xbf16, #tpu.memory_space<vmem>>, vector<16x128xbf16>,
    %cst_38 = arith.constant dense<0.000000e+00> : vector<16x128xf32>
    %53 = tpu.matmul %13, %48, %cst_38 {dimension_numbers = #tpu.dot_dimension_numbers<[1], [0], [0], [1], [0, 0, 1, 1], [], []>} : vector<16x16xbf16>, vector<16x128xbf16>, vector<16x128xf32> -> vector<16x128xf32>
    %54 = arith.truncf %53 : vector<16x128xf32> to vector<16x128xbf16>
    %c0_39 = arith.constant 0 : index
    %c256 = arith.constant 256 : index
    %55 = vector.load %arg10[%c0_39, %c256] : memref<16x384xbf16, #tpu.memory_space<vmem>>, vector<16x128xbf16>
    tpu.vector_store %arg10[%c0_39, %c256], %54 {strides = array<i32>} : memref<16x384xbf16, #tpu.memory_space<vmem>>, vector<16x128xbf16>,
    %c0_40 = arith.constant 0 : index
    %c0_41 = arith.constant 0 : index
    %56 = vector.load %arg10[%c0_40, %c0_41] : memref<16x384xbf16, #tpu.memory_space<vmem>>, vector<16x384xbf16>
    %c0_42 = arith.constant 0 : index
    %c0_43 = arith.constant 0 : index
    %57 = vector.load %arg3[%c0_42, %c0_43] : memref<384x128xbf16, #tpu.memory_space<vmem>>, vector<384x128xbf16>
    %cst_44 = arith.constant dense<0.000000e+00> : vector<16x128xf32>
    %58 = tpu.matmul %56, %57, %cst_44 {dimension_numbers = #tpu.dot_dimension_numbers<[1], [0], [0], [1], [0, 0, 1, 1], [], []>} : vector<16x384xbf16>, vector<384x128xbf16>, vector<16x128xf32> -> vector<16x128xf32>
    %c0_45 = arith.constant 0 : index
    %c0_46 = arith.constant 0 : index
    %59 = vector.load %arg5[%c0_45, %c0_46] : memref<2x128xf32, #tpu.memory_space<vmem>>, vector<1x128xf32>
    %60 = vector.broadcast %59 : vector<1x128xf32> to vector<16x128xf32>
    %61 = arith.mulf %58, %60 : vector<16x128xf32>
    %c1_47 = arith.constant 1 : index
    %c0_48 = arith.constant 0 : index
    %62 = vector.load %arg5[%c1_47, %c0_48] : memref<2x128xf32, #tpu.memory_space<vmem>>, vector<1x128xf32>
    %63 = vector.broadcast %62 : vector<1x128xf32> to vector<16x128xf32>
    %64 = arith.addf %61, %63 : vector<16x128xf32>
    %cst_49 = arith.constant 0.000000e+00 : f32
    %65 = vector.broadcast %cst_49 : f32 to vector<16x128xf32>
    %66 = arith.maximumf %64, %65 : vector<16x128xf32>
    %67 = vector.extract_strided_slice %66 {offsets = [0, 0], sizes = [16, 16], strides = [1, 1]} : vector<16x128xf32> to vector<16x16xf32>
    %c0_50 = arith.constant 0 : index
    %c0_51 = arith.constant 0 : index
    %c0_52 = arith.constant 0 : index
    %c0_53 = arith.constant 0 : index
    %68 = vector.load %arg7[%c0_50, %c0_51, %c0_52, %c0_53] : memref<1x8x16x16xf32, #tpu.memory_space<vmem>>, vector<1x1x16x16xf32>
    %69 = vector.shape_cast %68 : vector<1x1x16x16xf32> to vector<16x16xf32>
    %70 = vector.shape_cast %67 : vector<16x16xf32> to vector<1x1x16x16xf32>
    tpu.vector_store %arg7[%c0_50, %c0_51, %c0_52, %c0_53], %70 {strides = array<i32>} : memref<1x8x16x16xf32, #tpu.memory_space<vmem>>, vector<1x1x16x16xf32>,
    %71 = vector.extract_strided_slice %66 {offsets = [0, 16], sizes = [16, 16], strides = [1, 1]} : vector<16x128xf32> to vector<16x16xf32>
    %c0_54 = arith.constant 0 : index
    %c1_55 = arith.constant 1 : index
    %c0_56 = arith.constant 0 : index
    %c0_57 = arith.constant 0 : index
    %72 = vector.load %arg7[%c0_54, %c1_55, %c0_56, %c0_57] : memref<1x8x16x16xf32, #tpu.memory_space<vmem>>, vector<1x1x16x16xf32>
    %73 = vector.shape_cast %72 : vector<1x1x16x16xf32> to vector<16x16xf32>
    %74 = vector.shape_cast %71 : vector<16x16xf32> to vector<1x1x16x16xf32>
    tpu.vector_store %arg7[%c0_54, %c1_55, %c0_56, %c0_57], %74 {strides = array<i32>} : memref<1x8x16x16xf32, #tpu.memory_space<vmem>>, vector<1x1x16x16xf32>,
    %75 = vector.extract_strided_slice %66 {offsets = [0, 32], sizes = [16, 16], strides = [1, 1]} : vector<16x128xf32> to vector<16x16xf32>
    %c0_58 = arith.constant 0 : index
    %c2_59 = arith.constant 2 : index
    %c0_60 = arith.constant 0 : index
    %c0_61 = arith.constant 0 : index
    %76 = vector.load %arg7[%c0_58, %c2_59, %c0_60, %c0_61] : memref<1x8x16x16xf32, #tpu.memory_space<vmem>>, vector<1x1x16x16xf32>
    %77 = vector.shape_cast %76 : vector<1x1x16x16xf32> to vector<16x16xf32>
    %78 = vector.shape_cast %75 : vector<16x16xf32> to vector<1x1x16x16xf32>
    tpu.vector_store %arg7[%c0_58, %c2_59, %c0_60, %c0_61], %78 {strides = array<i32>} : memref<1x8x16x16xf32, #tpu.memory_space<vmem>>, vector<1x1x16x16xf32>,
    %79 = vector.extract_strided_slice %66 {offsets = [0, 48], sizes = [16, 16], strides = [1, 1]} : vector<16x128xf32> to vector<16x16xf32>
    %c0_62 = arith.constant 0 : index
    %c3_63 = arith.constant 3 : index
    %c0_64 = arith.constant 0 : index
    %c0_65 = arith.constant 0 : index
    %80 = vector.load %arg7[%c0_62, %c3_63, %c0_64, %c0_65] : memref<1x8x16x16xf32, #tpu.memory_space<vmem>>, vector<1x1x16x16xf32>
    %81 = vector.shape_cast %80 : vector<1x1x16x16xf32> to vector<16x16xf32>
    %82 = vector.shape_cast %79 : vector<16x16xf32> to vector<1x1x16x16xf32>
    tpu.vector_store %arg7[%c0_62, %c3_63, %c0_64, %c0_65], %82 {strides = array<i32>} : memref<1x8x16x16xf32, #tpu.memory_space<vmem>>, vector<1x1x16x16xf32>,
    %83 = vector.extract_strided_slice %66 {offsets = [0, 64], sizes = [16, 16], strides = [1, 1]} : vector<16x128xf32> to vector<16x16xf32>
    %c0_66 = arith.constant 0 : index
    %c4 = arith.constant 4 : index
    %c0_67 = arith.constant 0 : index
    %c0_68 = arith.constant 0 : index
    %84 = vector.load %arg7[%c0_66, %c4, %c0_67, %c0_68] : memref<1x8x16x16xf32, #tpu.memory_space<vmem>>, vector<1x1x16x16xf32>
    %85 = vector.shape_cast %84 : vector<1x1x16x16xf32> to vector<16x16xf32>
    %86 = vector.shape_cast %83 : vector<16x16xf32> to vector<1x1x16x16xf32>
    tpu.vector_store %arg7[%c0_66, %c4, %c0_67, %c0_68], %86 {strides = array<i32>} : memref<1x8x16x16xf32, #tpu.memory_space<vmem>>, vector<1x1x16x16xf32>,
    %87 = vector.extract_strided_slice %66 {offsets = [0, 80], sizes = [16, 16], strides = [1, 1]} : vector<16x128xf32> to vector<16x16xf32>
    %c0_69 = arith.constant 0 : index
    %c5 = arith.constant 5 : index
    %c0_70 = arith.constant 0 : index
    %c0_71 = arith.constant 0 : index
    %88 = vector.load %arg7[%c0_69, %c5, %c0_70, %c0_71] : memref<1x8x16x16xf32, #tpu.memory_space<vmem>>, vector<1x1x16x16xf32>
    %89 = vector.shape_cast %88 : vector<1x1x16x16xf32> to vector<16x16xf32>
    %90 = vector.shape_cast %87 : vector<16x16xf32> to vector<1x1x16x16xf32>
    tpu.vector_store %arg7[%c0_69, %c5, %c0_70, %c0_71], %90 {strides = array<i32>} : memref<1x8x16x16xf32, #tpu.memory_space<vmem>>, vector<1x1x16x16xf32>,
    %91 = vector.extract_strided_slice %66 {offsets = [0, 96], sizes = [16, 16], strides = [1, 1]} : vector<16x128xf32> to vector<16x16xf32>
    %c0_72 = arith.constant 0 : index
    %c6 = arith.constant 6 : index
    %c0_73 = arith.constant 0 : index
    %c0_74 = arith.constant 0 : index
    %92 = vector.load %arg7[%c0_72, %c6, %c0_73, %c0_74] : memref<1x8x16x16xf32, #tpu.memory_space<vmem>>, vector<1x1x16x16xf32>
    %93 = vector.shape_cast %92 : vector<1x1x16x16xf32> to vector<16x16xf32>
    %94 = vector.shape_cast %91 : vector<16x16xf32> to vector<1x1x16x16xf32>
    tpu.vector_store %arg7[%c0_72, %c6, %c0_73, %c0_74], %94 {strides = array<i32>} : memref<1x8x16x16xf32, #tpu.memory_space<vmem>>, vector<1x1x16x16xf32>,
    %95 = vector.extract_strided_slice %66 {offsets = [0, 112], sizes = [16, 16], strides = [1, 1]} : vector<16x128xf32> to vector<16x16xf32>
    %c0_75 = arith.constant 0 : index
    %c7 = arith.constant 7 : index
    %c0_76 = arith.constant 0 : index
    %c0_77 = arith.constant 0 : index
    %96 = vector.load %arg7[%c0_75, %c7, %c0_76, %c0_77] : memref<1x8x16x16xf32, #tpu.memory_space<vmem>>, vector<1x1x16x16xf32>
    %97 = vector.shape_cast %96 : vector<1x1x16x16xf32> to vector<16x16xf32>
    %98 = vector.shape_cast %95 : vector<16x16xf32> to vector<1x1x16x16xf32>
    tpu.vector_store %arg7[%c0_75, %c7, %c0_76, %c0_77], %98 {strides = array<i32>} : memref<1x8x16x16xf32, #tpu.memory_space<vmem>>, vector<1x1x16x16xf32>,
    %99 = vector.shape_cast %66 : vector<16x128xf32> to vector<8x2x128xf32>
    %cst_78 = arith.constant dense<0xFF800000> : vector<8x128xf32>
    %100 = vector.multi_reduction <maximumf>, %99, %cst_78 [1] : vector<8x2x128xf32> to vector<8x128xf32>
    %c0_79 = arith.constant 0 : index
    %c0_80 = arith.constant 0 : index
    %c0_81 = arith.constant 0 : index
    %101 = vector.load %arg6[%c0_79, %c0_80, %c0_81] : memref<2x128x64xf32, #tpu.memory_space<vmem>>, vector<1x128x64xf32>
    %102 = vector.shape_cast %101 : vector<1x128x64xf32> to vector<128x64xf32>
    %cst_82 = arith.constant dense<0.000000e+00> : vector<8x64xf32>
    %103 = tpu.matmul %100, %102, %cst_82 {dimension_numbers = #tpu.dot_dimension_numbers<[1], [0], [0], [1], [0, 0, 1, 1], [], []>, precision = #tpu.contract_precision<fp32>} : vector<8x128xf32>, vector<128x64xf32>, vector<8x64xf32> -> vector<8x64xf32>
    %c1_83 = arith.constant 1 : index
    %c0_84 = arith.constant 0 : index
    %c0_85 = arith.constant 0 : index
    %104 = vector.load %arg6[%c1_83, %c0_84, %c0_85] : memref<2x128x64xf32, #tpu.memory_space<vmem>>, vector<1x128x64xf32>
    %105 = vector.shape_cast %104 : vector<1x128x64xf32> to vector<128x64xf32>
    %cst_86 = arith.constant dense<0.000000e+00> : vector<8x64xf32>
    %106 = tpu.matmul %100, %105, %cst_86 {dimension_numbers = #tpu.dot_dimension_numbers<[1], [0], [0], [1], [0, 0, 1, 1], [], []>, precision = #tpu.contract_precision<fp32>} : vector<8x128xf32>, vector<128x64xf32>, vector<8x64xf32> -> vector<8x64xf32>
    %107 = arith.maximumf %103, %106 : vector<8x64xf32>
    %108 = vector.extract_strided_slice %107 {offsets = [0, 0], sizes = [8, 8], strides = [1, 1]} : vector<8x64xf32> to vector<8x8xf32>
    %c0_87 = arith.constant 0 : index
    %c0_88 = arith.constant 0 : index
    %c0_89 = arith.constant 0 : index
    %c0_90 = arith.constant 0 : index
    %109 = vector.load %arg8[%c0_87, %c0_88, %c0_89, %c0_90] : memref<1x8x8x8xf32, #tpu.memory_space<vmem>>, vector<1x1x8x8xf32>
    %110 = vector.shape_cast %109 : vector<1x1x8x8xf32> to vector<8x8xf32>
    %111 = vector.shape_cast %108 : vector<8x8xf32> to vector<1x1x8x8xf32>
    tpu.vector_store %arg8[%c0_87, %c0_88, %c0_89, %c0_90], %111 {strides = array<i32>} : memref<1x8x8x8xf32, #tpu.memory_space<vmem>>, vector<1x1x8x8xf32>,
    %112 = vector.extract_strided_slice %107 {offsets = [0, 8], sizes = [8, 8], strides = [1, 1]} : vector<8x64xf32> to vector<8x8xf32>
    %c0_91 = arith.constant 0 : index
    %c1_92 = arith.constant 1 : index
    %c0_93 = arith.constant 0 : index
    %c0_94 = arith.constant 0 : index
    %113 = vector.load %arg8[%c0_91, %c1_92, %c0_93, %c0_94] : memref<1x8x8x8xf32, #tpu.memory_space<vmem>>, vector<1x1x8x8xf32>
    %114 = vector.shape_cast %113 : vector<1x1x8x8xf32> to vector<8x8xf32>
    %115 = vector.shape_cast %112 : vector<8x8xf32> to vector<1x1x8x8xf32>
    tpu.vector_store %arg8[%c0_91, %c1_92, %c0_93, %c0_94], %115 {strides = array<i32>} : memref<1x8x8x8xf32, #tpu.memory_space<vmem>>, vector<1x1x8x8xf32>,
    %116 = vector.extract_strided_slice %107 {offsets = [0, 16], sizes = [8, 8], strides = [1, 1]} : vector<8x64xf32> to vector<8x8xf32>
    %c0_95 = arith.constant 0 : index
    %c2_96 = arith.constant 2 : index
    %c0_97 = arith.constant 0 : index
    %c0_98 = arith.constant 0 : index
    %117 = vector.load %arg8[%c0_95, %c2_96, %c0_97, %c0_98] : memref<1x8x8x8xf32, #tpu.memory_space<vmem>>, vector<1x1x8x8xf32>
    %118 = vector.shape_cast %117 : vector<1x1x8x8xf32> to vector<8x8xf32>
    %119 = vector.shape_cast %116 : vector<8x8xf32> to vector<1x1x8x8xf32>
    tpu.vector_store %arg8[%c0_95, %c2_96, %c0_97, %c0_98], %119 {strides = array<i32>} : memref<1x8x8x8xf32, #tpu.memory_space<vmem>>, vector<1x1x8x8xf32>,
    %120 = vector.extract_strided_slice %107 {offsets = [0, 24], sizes = [8, 8], strides = [1, 1]} : vector<8x64xf32> to vector<8x8xf32>
    %c0_99 = arith.constant 0 : index
    %c3_100 = arith.constant 3 : index
    %c0_101 = arith.constant 0 : index
    %c0_102 = arith.constant 0 : index
    %121 = vector.load %arg8[%c0_99, %c3_100, %c0_101, %c0_102] : memref<1x8x8x8xf32, #tpu.memory_space<vmem>>, vector<1x1x8x8xf32>
    %122 = vector.shape_cast %121 : vector<1x1x8x8xf32> to vector<8x8xf32>
    %123 = vector.shape_cast %120 : vector<8x8xf32> to vector<1x1x8x8xf32>
    tpu.vector_store %arg8[%c0_99, %c3_100, %c0_101, %c0_102], %123 {strides = array<i32>} : memref<1x8x8x8xf32, #tpu.memory_space<vmem>>, vector<1x1x8x8xf32>,
    %124 = vector.extract_strided_slice %107 {offsets = [0, 32], sizes = [8, 8], strides = [1, 1]} : vector<8x64xf32> to vector<8x8xf32>
    %c0_103 = arith.constant 0 : index
    %c4_104 = arith.constant 4 : index
    %c0_105 = arith.constant 0 : index
    %c0_106 = arith.constant 0 : index
    %125 = vector.load %arg8[%c0_103, %c4_104, %c0_105, %c0_106] : memref<1x8x8x8xf32, #tpu.memory_space<vmem>>, vector<1x1x8x8xf32>
    %126 = vector.shape_cast %125 : vector<1x1x8x8xf32> to vector<8x8xf32>
    %127 = vector.shape_cast %124 : vector<8x8xf32> to vector<1x1x8x8xf32>
    tpu.vector_store %arg8[%c0_103, %c4_104, %c0_105, %c0_106], %127 {strides = array<i32>} : memref<1x8x8x8xf32, #tpu.memory_space<vmem>>, vector<1x1x8x8xf32>,
    %128 = vector.extract_strided_slice %107 {offsets = [0, 40], sizes = [8, 8], strides = [1, 1]} : vector<8x64xf32> to vector<8x8xf32>
    %c0_107 = arith.constant 0 : index
    %c5_108 = arith.constant 5 : index
    %c0_109 = arith.constant 0 : index
    %c0_110 = arith.constant 0 : index
    %129 = vector.load %arg8[%c0_107, %c5_108, %c0_109, %c0_110] : memref<1x8x8x8xf32, #tpu.memory_space<vmem>>, vector<1x1x8x8xf32>
    %130 = vector.shape_cast %129 : vector<1x1x8x8xf32> to vector<8x8xf32>
    %131 = vector.shape_cast %128 : vector<8x8xf32> to vector<1x1x8x8xf32>
    tpu.vector_store %arg8[%c0_107, %c5_108, %c0_109, %c0_110], %131 {strides = array<i32>} : memref<1x8x8x8xf32, #tpu.memory_space<vmem>>, vector<1x1x8x8xf32>,
    %132 = vector.extract_strided_slice %107 {offsets = [0, 48], sizes = [8, 8], strides = [1, 1]} : vector<8x64xf32> to vector<8x8xf32>
    %c0_111 = arith.constant 0 : index
    %c6_112 = arith.constant 6 : index
    %c0_113 = arith.constant 0 : index
    %c0_114 = arith.constant 0 : index
    %133 = vector.load %arg8[%c0_111, %c6_112, %c0_113, %c0_114] : memref<1x8x8x8xf32, #tpu.memory_space<vmem>>, vector<1x1x8x8xf32>
    %134 = vector.shape_cast %133 : vector<1x1x8x8xf32> to vector<8x8xf32>
    %135 = vector.shape_cast %132 : vector<8x8xf32> to vector<1x1x8x8xf32>
    tpu.vector_store %arg8[%c0_111, %c6_112, %c0_113, %c0_114], %135 {strides = array<i32>} : memref<1x8x8x8xf32, #tpu.memory_space<vmem>>, vector<1x1x8x8xf32>,
    %136 = vector.extract_strided_slice %107 {offsets = [0, 56], sizes = [8, 8], strides = [1, 1]} : vector<8x64xf32> to vector<8x8xf32>
    %c0_115 = arith.constant 0 : index
    %c7_116 = arith.constant 7 : index
    %c0_117 = arith.constant 0 : index
    %c0_118 = arith.constant 0 : index
    %137 = vector.load %arg8[%c0_115, %c7_116, %c0_117, %c0_118] : memref<1x8x8x8xf32, #tpu.memory_space<vmem>>, vector<1x1x8x8xf32>
    %138 = vector.shape_cast %137 : vector<1x1x8x8xf32> to vector<8x8xf32>
    %139 = vector.shape_cast %136 : vector<8x8xf32> to vector<1x1x8x8xf32>
    tpu.vector_store %arg8[%c0_115, %c7_116, %c0_117, %c0_118], %139 {strides = array<i32>} : memref<1x8x8x8xf32, #tpu.memory_space<vmem>>, vector<1x1x8x8xf32>,
    return
  }
  func.func @transform_0(%arg0: i32) -> (i32, i32, i32, i32) {
    %c0_i32 = arith.constant 0 : i32
    %c0_i32_0 = arith.constant 0 : i32
    %c0_i32_1 = arith.constant 0 : i32
    %c0_i32_2 = arith.constant 0 : i32
    return %arg0, %c0_i32, %c0_i32_0, %c0_i32_1 : i32, i32, i32, i32
  }
  func.func @transform_1(%arg0: i32) -> (i32, i32) {
    %c0_i32 = arith.constant 0 : i32
    %c0_i32_0 = arith.constant 0 : i32
    %c0_i32_1 = arith.constant 0 : i32
    return %c0_i32, %c0_i32_0 : i32, i32
  }
  func.func @transform_2(%arg0: i32) -> (i32, i32) {
    %c0_i32 = arith.constant 0 : i32
    %c0_i32_0 = arith.constant 0 : i32
    %c0_i32_1 = arith.constant 0 : i32
    return %c0_i32, %c0_i32_0 : i32, i32
  }
  func.func @transform_3(%arg0: i32) -> (i32, i32) {
    %c0_i32 = arith.constant 0 : i32
    %c0_i32_0 = arith.constant 0 : i32
    %c0_i32_1 = arith.constant 0 : i32
    return %c0_i32, %c0_i32_0 : i32, i32
  }
  func.func @transform_4(%arg0: i32) -> (i32, i32) {
    %c0_i32 = arith.constant 0 : i32
    %c0_i32_0 = arith.constant 0 : i32
    %c0_i32_1 = arith.constant 0 : i32
    return %c0_i32, %c0_i32_0 : i32, i32
  }
  func.func @transform_5(%arg0: i32) -> (i32, i32, i32) {
    %c0_i32 = arith.constant 0 : i32
    %c0_i32_0 = arith.constant 0 : i32
    %c0_i32_1 = arith.constant 0 : i32
    %c0_i32_2 = arith.constant 0 : i32
    return %c0_i32, %c0_i32_0, %c0_i32_1 : i32, i32, i32
  }
  func.func @transform_6(%arg0: i32) -> (i32, i32, i32, i32) {
    %c0_i32 = arith.constant 0 : i32
    %c0_i32_0 = arith.constant 0 : i32
    %c0_i32_1 = arith.constant 0 : i32
    %c0_i32_2 = arith.constant 0 : i32
    return %arg0, %c0_i32, %c0_i32_0, %c0_i32_1 : i32, i32, i32, i32
  }
  func.func @transform_7(%arg0: i32) -> (i32, i32, i32, i32) {
    %c0_i32 = arith.constant 0 : i32
    %c0_i32_0 = arith.constant 0 : i32
    %c0_i32_1 = arith.constant 0 : i32
    %c0_i32_2 = arith.constant 0 : i32
    return %arg0, %c0_i32, %c0_i32_0, %c0_i32_1 : i32, i32, i32, i32
  }
}

</mosaic_0001>

<llo_original>
// kernel: encoder_forward.1
$region0: #{encoder_forward.1}
  #allocation0 [shape = 'u32[]', space=smem, size = 0x4, offset = 0x4, fixed_abs, tag = 'smem constant byte address 0x4 - core index']
  #allocation1 [shape = 'u32[144,128]{1,0:T(1,128)}', space=vmem, size = 0x12000, scoped, tag = 'internal scratch']
  #allocation2 [shape = 'bf16[16,192]{1,0:T(16,128)(2,1)}', space=vmem, size = 0x2000, scoped, tag = 'scratch operand']
  #allocation3 [shape = 'bf16[16,384]{1,0:T(16,128)(2,1)}', space=vmem, size = 0x3000, scoped, tag = 'scratch operand']
  %s0 = inlined_call_operand.vmem [shape: f32[2,4,16,16], index: 0, kind: input, shape index: {}]
  %s1 = inlined_call_operand.vmem [shape: bf16[192,128], index: 1, kind: input, shape index: {}]
  %s2 = inlined_call_operand.vmem [shape: bf16[384,128], index: 2, kind: input, shape index: {}]
  %s3 = inlined_call_operand.vmem [shape: f32[2,128], index: 3, kind: input, shape index: {}]
  %s4 = inlined_call_operand.vmem [shape: f32[2,128], index: 4, kind: input, shape index: {}]
  %s5 = inlined_call_operand.vmem [shape: f32[2,128,64], index: 5, kind: input, shape index: {}]
  %s6 = inlined_call_operand.hbm [shape: f32[2,8,16,16], index: 6, kind: output, shape index: {0}]
  %s7 = inlined_call_operand.hbm [shape: f32[2,8,8,8], index: 7, kind: output, shape index: {1}]
  %8 = xla_tuple %s6, %s7
  %s9 = sld [smem:[#allocation0]]
  $region65: #{encoder_forward.1} parent=0
    _
  %s11 = ssub.s32 1, %s9
  %s12 = scalar_select 0, %s11, %s9
  $region1: #{encoder_forward.1} parent=0
    #allocation4 [shape = 'u8[131072]{0}', space=vmem, size = 0x20000, scoped, tag = 'output window, operand 0']
    #allocation5 [shape = 's32[2]{0}', space=sflag, size = 0x8, scoped, tag = 'scoped memory for encoder_forward.1']
    #allocation6 [shape = 'u8[65536]{0}', space=vmem, size = 0x10000, scoped, tag = 'output window, operand 1']
    #allocation7 [shape = 's32[2]{0}', space=sflag, size = 0x8, scoped, tag = 'scoped memory for encoder_forward.1']
    %13 = vsyncpa [#allocation5], 0
    %s14 = scalar_lea.sflag [#allocation5], 1
    %15 = vsyncpa %s14, 0
    %16 = vsyncpa [#allocation7], 0
    %s17 = scalar_lea.sflag [#allocation7], 1
    %18 = vsyncpa %s17, 0
    loop: start=0, step=1, limit=4
    $region2: #{encoder_forward.1} parent=1 // loop_pre_header
      _
    $region3: #{encoder_forward.1} parent=1 // loop_header
      %s20 = sphi 0, %s24
      %p21 = scmp.ge.s32.totalorder %s20, 4
      %s30 = sphi 0, %s32
      %s33 = sphi 0, %s30
      %s34 = sphi 0, %s33
      %s50 = sphi 0, %s34
      %s54 = sphi 0, %s54
      %s56 = sphi 0, %s54
      %s57 = sphi 0, %s56
      %s71 = sphi 0, %s57
      %s75 = sphi 0, %s75
      %s77 = sphi 0, %s75
      %s78 = sphi 0, %s77
      %s92 = sphi 0, %s78
      %s96 = sphi 0, %s96
      %s98 = sphi 0, %s96
      %s99 = sphi 0, %s98
      %s113 = sphi 0, %s99
      %s117 = sphi 0, %s117
      %s119 = sphi 0, %s117
      %s120 = sphi 0, %s119
      %s134 = sphi 0, %s120
      %s138 = sphi 0, %s138
      %s140 = sphi 0, %s138
      %s141 = sphi 0, %s140
      %s155 = sphi 0, %s141
      %s161 = sphi 0, %s163
      %s164 = sphi 0, %s161
      %s165 = sphi 0, %s164
      %s181 = sphi 0, %s165
      %s187 = sphi 0, %s189
      %s190 = sphi 0, %s187
      %s191 = sphi 0, %s190
      %s207 = sphi 0, %s191
    $region4: #{encoder_forward.1} parent=1 // loop_header_branch
      %23 = sbr.rel (%p21) target = $region8
    $region5: #{encoder_forward.1} parent=1 // loop_body
      %s25 = ssub.s32 %s20, 1
      %s26 = ssub.s32 %s20, 2
      %s27 = sadd.s32 %s20, 1
      %s28 = ssub.s32 %s20, %s27
      %p29 = scmp.eq.s32.totalorder %s28, 0
      %s31 = sadd.s32 %s30, 1
      %s32 = scalar_select %p29, %s30, %s31
      %p35 = pneg %p29
      %p36 = scmp.eq.s32.totalorder %s20, 1
      %p37 = por %p35, %p36
      %p38 = scmp.ne.s32.totalorder %s30, %s33
      %p39 = scmp.eq.s32.totalorder %s20, 0
      %p40 = por %p38, %p39
      %p41 = scmp.ne.s32.totalorder %s30, %s33
      %p42 = scmp.eq.s32.totalorder %s25, 1
      %p43 = por %p41, %p42
      %p44 = scmp.ne.s32.totalorder %s33, %s34
      %p45 = scmp.eq.s32.totalorder %s25, 0
      %p46 = por %p44, %p45
      %p47 = scmp.ne.s32.totalorder %s33, %s34
      %p48 = scmp.eq.s32.totalorder %s26, 1
      %p49 = por %p47, %p48
      %p51 = scmp.ne.s32.totalorder %s34, %s50
      %p52 = scmp.eq.s32.totalorder %s26, 0
      %p53 = por %p51, %p52
      %s55 = sadd.s32 %s54, 1
      %p58 = scmp.eq.s32.totalorder %s20, 1
      %p59 = scmp.ne.s32.totalorder %s54, %s56
      %p60 = scmp.eq.s32.totalorder %s20, 0
      %p61 = por %p59, %p60
      %p62 = scmp.ne.s32.totalorder %s54, %s56
      %p63 = scmp.eq.s32.totalorder %s25, 1
      %p64 = por %p62, %p63
      %p65 = scmp.ne.s32.totalorder %s56, %s57
      %p66 = scmp.eq.s32.totalorder %s25, 0
      %p67 = por %p65, %p66
      %p68 = scmp.ne.s32.totalorder %s56, %s57
      %p69 = scmp.eq.s32.totalorder %s26, 1
      %p70 = por %p68, %p69
      %p72 = scmp.ne.s32.totalorder %s57, %s71
      %p73 = scmp.eq.s32.totalorder %s26, 0
      %p74 = por %p72, %p73
      %s76 = sadd.s32 %s75, 1
      %p79 = scmp.eq.s32.totalorder %s20, 1
      %p80 = scmp.ne.s32.totalorder %s75, %s77
      %p81 = scmp.eq.s32.totalorder %s20, 0
      %p82 = por %p80, %p81
      %p83 = scmp.ne.s32.totalorder %s75, %s77
      %p84 = scmp.eq.s32.totalorder %s25, 1
      %p85 = por %p83, %p84
      %p86 = scmp.ne.s32.totalorder %s77, %s78
      %p87 = scmp.eq.s32.totalorder %s25, 0
      %p88 = por %p86, %p87
      %p89 = scmp.ne.s32.totalorder %s77, %s78
      %p90 = scmp.eq.s32.totalorder %s26, 1
      %p91 = por %p89, %p90
      %p93 = scmp.ne.s32.totalorder %s78, %s92
      %p94 = scmp.eq.s32.totalorder %s26, 0
      %p95 = por %p93, %p94
      %s97 = sadd.s32 %s96, 1
      %p100 = scmp.eq.s32.totalorder %s20, 1
      %p101 = scmp.ne.s32.totalorder %s96, %s98
      %p102 = scmp.eq.s32.totalorder %s20, 0
      %p103 = por %p101, %p102
      %p104 = scmp.ne.s32.totalorder %s96, %s98
      %p105 = scmp.eq.s32.totalorder %s25, 1
      %p106 = por %p104, %p105
      %p107 = scmp.ne.s32.totalorder %s98, %s99
      %p108 = scmp.eq.s32.totalorder %s25, 0
      %p109 = por %p107, %p108
      %p110 = scmp.ne.s32.totalorder %s98, %s99
      %p111 = scmp.eq.s32.totalorder %s26, 1
      %p112 = por %p110, %p111
      %p114 = scmp.ne.s32.totalorder %s99, %s113
      %p115 = scmp.eq.s32.totalorder %s26, 0
      %p116 = por %p114, %p115
      %s118 = sadd.s32 %s117, 1
      %p121 = scmp.eq.s32.totalorder %s20, 1
      %p122 = scmp.ne.s32.totalorder %s117, %s119
      %p123 = scmp.eq.s32.totalorder %s20, 0
      %p124 = por %p122, %p123
      %p125 = scmp.ne.s32.totalorder %s117, %s119
      %p126 = scmp.eq.s32.totalorder %s25, 1
      %p127 = por %p125, %p126
      %p128 = scmp.ne.s32.totalorder %s119, %s120
      %p129 = scmp.eq.s32.totalorder %s25, 0
      %p130 = por %p128, %p129
      %p131 = scmp.ne.s32.totalorder %s119, %s120
      %p132 = scmp.eq.s32.totalorder %s26, 1
      %p133 = por %p131, %p132
      %p135 = scmp.ne.s32.totalorder %s120, %s134
      %p136 = scmp.eq.s32.totalorder %s26, 0
      %p137 = por %p135, %p136
      %s139 = sadd.s32 %s138, 1
      %p142 = scmp.eq.s32.totalorder %s20, 1
      %p143 = scmp.ne.s32.totalorder %s138, %s140
      %p144 = scmp.eq.s32.totalorder %s20, 0
      %p145 = por %p143, %p144
      %p146 = scmp.ne.s32.totalorder %s138, %s140
      %p147 = scmp.eq.s32.totalorder %s25, 1
      %p148 = por %p146, %p147
      %p149 = scmp.ne.s32.totalorder %s140, %s141
      %p150 = scmp.eq.s32.totalorder %s25, 0
      %p151 = por %p149, %p150
      %p152 = scmp.ne.s32.totalorder %s140, %s141
      %p153 = scmp.eq.s32.totalorder %s26, 1
      %p154 = por %p152, %p153
      %p156 = scmp.ne.s32.totalorder %s141, %s155
      %p157 = scmp.eq.s32.totalorder %s26, 0
      %p158 = por %p156, %p157
      %s159 = ssub.s32 %s20, %s27
      %p160 = scmp.eq.s32.totalorder %s159, 0
      %s162 = sadd.s32 %s161, 1
      %s163 = scalar_select %p160, %s161, %s162
      %p166 = pneg %p160
      %p167 = scmp.eq.s32.totalorder %s20, 1
      %p168 = por %p166, %p167
      %p169 = scmp.ne.s32.totalorder %s161, %s164
      %p170 = scmp.eq.s32.totalorder %s20, 0
      %p171 = por %p169, %p170
      %p172 = scmp.ne.s32.totalorder %s161, %s164
      %p173 = scmp.eq.s32.totalorder %s25, 1
      %p174 = por %p172, %p173
      %p175 = scmp.ne.s32.totalorder %s164, %s165
      %p176 = scmp.eq.s32.totalorder %s25, 0
      %p177 = por %p175, %p176
      %p178 = scmp.ne.s32.totalorder %s164, %s165
      %p179 = scmp.eq.s32.totalorder %s26, 1
      %p180 = por %p178, %p179
      %p182 = scmp.ne.s32.totalorder %s165, %s181
      %p183 = scmp.eq.s32.totalorder %s26, 0
      %p184 = por %p182, %p183
      %s185 = ssub.s32 %s20, %s27
      %p186 = scmp.eq.s32.totalorder %s185, 0
      %s188 = sadd.s32 %s187, 1
      %s189 = scalar_select %p186, %s187, %s188
      %p192 = pneg %p186
      %p193 = scmp.eq.s32.totalorder %s20, 1
      %p194 = por %p192, %p193
      %p195 = scmp.ne.s32.totalorder %s187, %s190
      %p196 = scmp.eq.s32.totalorder %s20, 0
      %p197 = por %p195, %p196
      %p198 = scmp.ne.s32.totalorder %s187, %s190
      %p199 = scmp.eq.s32.totalorder %s25, 1
      %p200 = por %p198, %p199
      %p201 = scmp.ne.s32.totalorder %s190, %s191
      %p202 = scmp.eq.s32.totalorder %s25, 0
      %p203 = por %p201, %p202
      %p204 = scmp.ne.s32.totalorder %s190, %s191
      %p205 = scmp.eq.s32.totalorder %s26, 1
      %p206 = por %p204, %p205
      %p208 = scmp.ne.s32.totalorder %s191, %s207
      %p209 = scmp.eq.s32.totalorder %s26, 0
      %p210 = por %p208, %p209
      %p211 = scmp.le.s32.totalorder 1, %s20
      %p212 = scmp.lt.s32.totalorder %s20, 3
      %p213 = pnand %p211, %p212
      %p214 = pneg %p213
      // Predicated region
      $region9: #{encoder_forward.1} parent=5 // pred_check
        _
      $region10: #{encoder_forward.1} parent=5 // pred_check_branch
        %216 = sbr.rel (%p213) target = $region12
      $region11: #{encoder_forward.1} parent=5 // pred_region
        %s217 = ssub.s32 %s20, 1
        // Predicated region
        $region13: #{encoder_forward.1} parent=11 // pred_check
          %p218 = pneg %p67
        $region14: #{encoder_forward.1} parent=11 // pred_check_branch
          %220 = sbr.rel (%p218) target = $region16
        $region15: #{encoder_forward.1} parent=11 // pred_region
          _
        $region16: #{encoder_forward.1} parent=11 // pred_fallthru
          _
        // Predicated region
        $region17: #{encoder_forward.1} parent=11 // pred_check
          %p221 = pneg %p88
        $region18: #{encoder_forward.1} parent=11 // pred_check_branch
          %223 = sbr.rel (%p221) target = $region20
        $region19: #{encoder_forward.1} parent=11 // pred_region
          _
        $region20: #{encoder_forward.1} parent=11 // pred_fallthru
          _
        // Predicated region
        $region21: #{encoder_forward.1} parent=11 // pred_check
          %p224 = pneg %p109
        $region22: #{encoder_forward.1} parent=11 // pred_check_branch
          %226 = sbr.rel (%p224) target = $region24
        $region23: #{encoder_forward.1} parent=11 // pred_region
          _
        $region24: #{encoder_forward.1} parent=11 // pred_fallthru
          _
        // Predicated region
        $region25: #{encoder_forward.1} parent=11 // pred_check
          %p227 = pneg %p130
        $region26: #{encoder_forward.1} parent=11 // pred_check_branch
          %229 = sbr.rel (%p227) target = $region28
        $region27: #{encoder_forward.1} parent=11 // pred_region
          _
        $region28: #{encoder_forward.1} parent=11 // pred_fallthru
          _
        // Predicated region
        $region29: #{encoder_forward.1} parent=11 // pred_check
          %p230 = pneg %p151
        $region30: #{encoder_forward.1} parent=11 // pred_check_branch
          %232 = sbr.rel (%p230) target = $region32
        $region31: #{encoder_forward.1} parent=11 // pred_region
          _
        $region32: #{encoder_forward.1} parent=11 // pred_fallthru
          _
      $region12: #{encoder_forward.1} parent=5 // pred_fallthru
        _
      %p233 = scmp.lt.s32.totalorder %s20, 2
      // Predicated region
      $region33: #{encoder_forward.1} parent=5 // pred_check
        %p234 = pneg %p233
      $region34: #{encoder_forward.1} parent=5 // pred_check_branch
        %236 = sbr.rel (%p234) target = $region36
      $region35: #{encoder_forward.1} parent=5 // pred_region
        // Predicated region
        $region37: #{encoder_forward.1} parent=35 // pred_check
          %p237 = pneg %p40
        $region38: #{encoder_forward.1} parent=35 // pred_check_branch
          %239 = sbr.rel (%p237) target = $region40
        $region39: #{encoder_forward.1} parent=35 // pred_region
          %p240 = scmp.lt.s32.totalorder %s20, 1
          %s241 = scalar_select %p240, %s20, 1
          %s242 = smul.addr %s241, 8
          %s243 = smul.addr %s242, 8
          %s244 = scalar_lea.vmem %s0, %s243
        $region40: #{encoder_forward.1} parent=35 // pred_fallthru
          _
      $region36: #{encoder_forward.1} parent=5 // pred_fallthru
        _
      %p245 = scmp.le.s32.totalorder 1, %s20
      %p246 = scmp.lt.s32.totalorder %s20, 3
      %p247 = pnand %p245, %p246
      %p248 = pneg %p247
      // Predicated region
      $region41: #{encoder_forward.1} parent=5 // pred_check
        _
      $region42: #{encoder_forward.1} parent=5 // pred_check_branch
        %250 = sbr.rel (%p247) target = $region44
      $region43: #{encoder_forward.1} parent=5 // pred_region
        %s251 = ssub.s32 %s20, 1
        %p252 = scmp.lt.s32.totalorder %s25, 1
        %s253 = scalar_select %p252, %s25, 1
        %s254 = smul.addr %s253, 8
        %s255 = smul.addr %s254, 8
        %s256 = scalar_lea.vmem %s0, %s255
        %p257 = pneg %p46
        %p258 = pneg %p43
        %p259 = pneg %p67
        %p260 = pneg %p64
        %p261 = pneg %p88
        %p262 = pneg %p85
        %p263 = pneg %p109
        %p264 = pneg %p106
        %p265 = pneg %p130
        %p266 = pneg %p127
        %p267 = pneg %p151
        %p268 = pneg %p148
        %p269 = pneg %p177
        %p270 = pneg %p174
        %s271 = sand.u32 %s164, 1
        %s272 = scalar_lea.sflag [#allocation5], %s271
        %s273 = sand.u32 %s164, 1
        %s274 = smul.addr %s273, 128
        %s275 = scalar_lea.vmem [#allocation4], %s274
        %p276 = pneg %p203
        %p277 = pneg %p200
        %s278 = sand.u32 %s190, 1
        %s279 = scalar_lea.sflag [#allocation7], %s278
        %s280 = sand.u32 %s190, 1
        %s281 = smul.addr %s280, 64
        %s282 = scalar_lea.vmem [#allocation6], %s281
        %p283 = scmp.lt.s32.totalorder %s25, 1
        %s284 = scalar_select %p283, %s25, 1
        %s285 = smul.addr %s284, 8
        %s286 = smul.addr %s285, 8
        %s287 = scalar_lea.vmem %s0, %s286
        %v289 = vlaneseq
        %v290 = vshrl.u32 %v289, 7
        %v291 = vadd.s32 %v290, 8
        %v292 = vlaneseq
        %v293 = vand.u32 %v292, 127
        %v294 = vsub.s32 %v290, 1
        %v295 = vsub.s32 %v291, 1
        %vm296 = vcmp.eq.s32.totalorder %v293, %v294
        %vm297 = vcmp.eq.s32.totalorder %v293, %v295
        %v298 = vsel %vm296, 1, 0
        %v299 = vsel %vm297, 1, 0
        %v300 = vcvt.s32.f32 %v298
        %v301 = vcvt.s32.f32 %v299
        %v302 = vpack.c.bf16 %v301, %v300
        %v303 = vadd.s32 %v290, 1
        %v304 = vadd.s32 %v291, 1
        %vm305 = vcmp.eq.s32.totalorder %v293, %v303
        %vm306 = vcmp.eq.s32.totalorder %v293, %v304
        %v307 = vsel %vm305, 1, 0
        %v308 = vsel %vm306, 1, 0
        %v309 = vcvt.s32.f32 %v307
        %v310 = vcvt.s32.f32 %v308
        %v311 = vpack.c.bf16 %v310, %v309
        %v312 = vld [vmem:[%s287] sm:$0xff]
        %v313 = vld [vmem:[%s287 + $0x8] sm:$0xff]
        %v314 = vpack.c.bf16 %v313, %v312
        %316 = vrot.lane.b32.xlu0 %v314, 64
        %v317 = vpop.permute.xlu0 %316
        %vm319 = vcmask 654848
        %320 = vst.msk [vmem:[#allocation2] sm:$0xff] %vm319, %v317
        %s321 = scalar_lea.vmem %s287, 16
        %v322 = vld [vmem:[%s321] sm:$0xff]
        %v323 = vld [vmem:[%s321 + $0x8] sm:$0xff]
        %v324 = vpack.c.bf16 %v323, %v322
        %326 = vrot.lane.b32.xlu0 %v324, 80
        %v327 = vpop.permute.xlu0 %326
        %vm329 = vcmask 786048
        %330 = vst.msk [vmem:[#allocation2] sm:$0xff] %vm329, %v327
        %s331 = scalar_lea.vmem %s287, 32
        %v332 = vld [vmem:[%s331] sm:$0xff]
        %v333 = vld [vmem:[%s331 + $0x8] sm:$0xff]
        %v334 = vpack.c.bf16 %v333, %v332
        %336 = vrot.lane.b32.xlu0 %v334, 96
        %v337 = vpop.permute.xlu0 %336
        %vm339 = vcmask 917248
        %340 = vst.msk [vmem:[#allocation2] sm:$0xff] %vm339, %v337
        %s341 = scalar_lea.vmem %s287, 48
        %v342 = vld [vmem:[%s341] sm:$0xff]
        %v343 = vld [vmem:[%s341 + $0x8] sm:$0xff]
        %v344 = vpack.c.bf16 %v343, %v342
        %346 = vrot.lane.b32.xlu0 %v344, 112
        %v347 = vpop.permute.xlu0 %346
        %vm349 = vcmask 1048448
        %350 = vst.msk [vmem:[#allocation2] sm:$0xff] %vm349, %v347
        %v351 = vld [vmem:[#allocation2] sm:$0xff]
        %353 = vrot.lane.b32.xlu0 %v351, 64
        %v354 = vpop.permute.xlu0 %353
        %vm356 = vcmask 130048
        %v358 = vsel %vm356, %v302, 0
        %360 = vmatprep.subr.bf16.mxu0 0
        %361 = vmatpush1.bf16.msra.mxu0 %v354
        %362 = vmatprep.subr.bf16.mxu0 0
        %363 = vmatpush1.bf16.msra.mxu0 0
        %364 = vmatprep.subr.bf16.mxu0 0
        %365 = vmatpush1.bf16.msra.mxu0 0
        %366 = vmatprep.subr.bf16.mxu0 0
        %367 = vmatpush1.bf16.msra.mxu0 0
        %368 = vmatprep.subr.bf16.mxu0 0
        %369 = vmatpush1.bf16.msra.mxu0 0
        %370 = vmatprep.subr.bf16.mxu0 0
        %371 = vmatpush1.bf16.msra.mxu0 0
        %372 = vmatprep.subr.bf16.mxu0 0
        %373 = vmatpush1.bf16.msra.mxu0 0
        %374 = vmatprep.subr.bf16.mxu0 0
        %375 = vmatpush1.bf16.msra.mxu0 0
        %376 = vmatprep.subr.bf16.mxu0 0
        %377 = vmatpush1.bf16.msra.mxu0 0
        %378 = vmatprep.subr.bf16.mxu0 0
        %379 = vmatpush1.bf16.msra.mxu0 0
        %380 = vmatprep.subr.bf16.mxu0 0
        %381 = vmatpush1.bf16.msra.mxu0 0
        %382 = vmatprep.subr.bf16.mxu0 0
        %383 = vmatpush1.bf16.msra.mxu0 0
        %384 = vmatprep.subr.bf16.mxu0 0
        %385 = vmatpush1.bf16.msra.mxu0 0
        %386 = vmatprep.subr.bf16.mxu0 0
        %387 = vmatpush1.bf16.msra.mxu0 0
        %388 = vmatprep.subr.bf16.mxu0 0
        %389 = vmatpush1.bf16.msra.mxu0 0
        %390 = vmatprep.subr.bf16.mxu0 0
        %391 = vmatpush1.bf16.msra.mxu0 0
        %392 = vmatprep.mubr.bf16.mxu0 0
        %393 = vmatmul.mubr.bf16.gmra.mrb[0].mxu0 %v358
        %v394 = vpop.f32.mrb[0].mxu0
        %v395 = vadd.f32 0.0, %v394
        %v396 = vpop.f32.mrb[0].mxu0
        %v397 = vpop.f32.mrb[0].mxu0
        %v398 = vadd.f32 0.0, %v397
        %v399 = vpop.f32.mrb[0].mxu0
        %400 = vdwg.mxu0
        %v401 = vpack.c.bf16 %v398, %v395
        %vm402 = vcmask 523264
        %403 = vst.msk [vmem:[#allocation2] sm:$0xff] %vm402, %v401
        %v405 = vsel %vm356, %v311, 0
        %407 = vmatprep.subr.bf16.mxu0 0
        %408 = vmatpush1.bf16.msra.mxu0 %v354
        %409 = vmatprep.subr.bf16.mxu0 0
        %410 = vmatpush1.bf16.msra.mxu0 0
        %411 = vmatprep.subr.bf16.mxu0 0
        %412 = vmatpush1.bf16.msra.mxu0 0
        %413 = vmatprep.subr.bf16.mxu0 0
        %414 = vmatpush1.bf16.msra.mxu0 0
        %415 = vmatprep.subr.bf16.mxu0 0
        %416 = vmatpush1.bf16.msra.mxu0 0
        %417 = vmatprep.subr.bf16.mxu0 0
        %418 = vmatpush1.bf16.msra.mxu0 0
        %419 = vmatprep.subr.bf16.mxu0 0
        %420 = vmatpush1.bf16.msra.mxu0 0
        %421 = vmatprep.subr.bf16.mxu0 0
        %422 = vmatpush1.bf16.msra.mxu0 0
        %423 = vmatprep.subr.bf16.mxu0 0
        %424 = vmatpush1.bf16.msra.mxu0 0
        %425 = vmatprep.subr.bf16.mxu0 0
        %426 = vmatpush1.bf16.msra.mxu0 0
        %427 = vmatprep.subr.bf16.mxu0 0
        %428 = vmatpush1.bf16.msra.mxu0 0
        %429 = vmatprep.subr.bf16.mxu0 0
        %430 = vmatpush1.bf16.msra.mxu0 0
        %431 = vmatprep.subr.bf16.mxu0 0
        %432 = vmatpush1.bf16.msra.mxu0 0
        %433 = vmatprep.subr.bf16.mxu0 0
        %434 = vmatpush1.bf16.msra.mxu0 0
        %435 = vmatprep.subr.bf16.mxu0 0
        %436 = vmatpush1.bf16.msra.mxu0 0
        %437 = vmatprep.subr.bf16.mxu0 0
        %438 = vmatpush1.bf16.msra.mxu0 0
        %439 = vmatprep.mubr.bf16.mxu0 0
        %440 = vmatmul.mubr.bf16.gmra.mrb[0].mxu0 %v405
        %v441 = vpop.f32.mrb[0].mxu0
        %v442 = vadd.f32 0.0, %v441
        %v443 = vpop.f32.mrb[0].mxu0
        %v444 = vpop.f32.mrb[0].mxu0
        %v445 = vadd.f32 0.0, %v444
        %v446 = vpop.f32.mrb[0].mxu0
        %447 = vdwg.mxu0
        %v448 = vpack.c.bf16 %v445, %v442
        %449 = vst.msk [vmem:[#allocation2 + $0x8] sm:$0xff] %vm402, %v448
        %v450 = vld [vmem:[#allocation2] sm:$0xff]
        %v451 = vld [vmem:[#allocation2 + $0x8] sm:$0xff]
        %v452 = vld [vmem:[%s1] sm:$0xf]
        %v453 = vld [vmem:[%s1 + $0x4] sm:$0xf]
        %v454 = vld [vmem:[%s1 + $0x8] sm:$0xf]
        %v455 = vld [vmem:[%s1 + $0xc] sm:$0xf]
        %v456 = vld [vmem:[%s1 + $0x10] sm:$0xf]
        %v457 = vld [vmem:[%s1 + $0x14] sm:$0xf]
        %v458 = vld [vmem:[%s1 + $0x18] sm:$0xf]
        %v459 = vld [vmem:[%s1 + $0x1c] sm:$0xf]
        %v460 = vld [vmem:[%s1 + $0x20] sm:$0xf]
        %v461 = vld [vmem:[%s1 + $0x24] sm:$0xf]
        %v462 = vld [vmem:[%s1 + $0x28] sm:$0xf]
        %v463 = vld [vmem:[%s1 + $0x2c] sm:$0xf]
        %v464 = vld [vmem:[%s1 + $0x30] sm:$0xf]
        %v465 = vld [vmem:[%s1 + $0x34] sm:$0xf]
        %v466 = vld [vmem:[%s1 + $0x38] sm:$0xf]
        %v467 = vld [vmem:[%s1 + $0x3c] sm:$0xf]
        %v468 = vld [vmem:[%s1 + $0x40] sm:$0xf]
        %v469 = vld [vmem:[%s1 + $0x44] sm:$0xf]
        %v470 = vld [vmem:[%s1 + $0x48] sm:$0xf]
        %v471 = vld [vmem:[%s1 + $0x4c] sm:$0xf]
        %v472 = vld [vmem:[%s1 + $0x50] sm:$0xf]
        %v473 = vld [vmem:[%s1 + $0x54] sm:$0xf]
        %v474 = vld [vmem:[%s1 + $0x58] sm:$0xf]
        %v475 = vld [vmem:[%s1 + $0x5c] sm:$0xf]
        %v500 = vunpack.c.l.b16 %v452
        %v501 = vunpack.c.l.b16 %v453
        %v502 = vunpack.c.l.b16 %v454
        %v503 = vunpack.c.l.b16 %v455
        %v504 = vunpack.c.l.b16 %v456
        %v505 = vunpack.c.l.b16 %v457
        %v506 = vunpack.c.l.b16 %v458
        %v507 = vunpack.c.l.b16 %v459
        %v508 = vunpack.c.l.b16 %v460
        %v509 = vunpack.c.l.b16 %v461
        %v510 = vunpack.c.l.b16 %v462
        %v511 = vunpack.c.l.b16 %v463
        %v512 = vunpack.c.l.b16 %v464
        %v513 = vunpack.c.l.b16 %v465
        %v514 = vunpack.c.l.b16 %v466
        %v515 = vunpack.c.l.b16 %v467
        %v516 = vunpack.c.l.b16 %v468
        %v517 = vunpack.c.l.b16 %v469
        %v518 = vunpack.c.l.b16 %v470
        %v519 = vunpack.c.l.b16 %v471
        %v520 = vunpack.c.l.b16 %v472
        %v521 = vunpack.c.l.b16 %v473
        %v522 = vunpack.c.l.b16 %v474
        %v523 = vunpack.c.l.b16 %v475
        %v524 = vpack.c.b16 %v501, %v500
        %v525 = vpack.c.b16 %v503, %v502
        %v526 = vpack.c.b16 %v505, %v504
        %v527 = vpack.c.b16 %v507, %v506
        %v528 = vpack.c.b16 %v509, %v508
        %v529 = vpack.c.b16 %v511, %v510
        %v530 = vpack.c.b16 %v513, %v512
        %v531 = vpack.c.b16 %v515, %v514
        %v532 = vpack.c.b16 %v517, %v516
        %v533 = vpack.c.b16 %v519, %v518
        %v534 = vpack.c.b16 %v521, %v520
        %v535 = vpack.c.b16 %v523, %v522
        %v549 = vsel %vm402, %v451, 0
        %551 = vmatprep.subr.bf16.mxu0 0
        %552 = vmatpush1.bf16.msra.mxu0 %v524
        %553 = vmatprep.subr.bf16.mxu0 0
        %554 = vmatpush1.bf16.msra.mxu0 %v525
        %555 = vmatprep.subr.bf16.mxu0 0
        %556 = vmatpush1.bf16.msra.mxu0 %v526
        %557 = vmatprep.subr.bf16.mxu0 0
        %558 = vmatpush1.bf16.msra.mxu0 %v527
        %559 = vmatprep.subr.bf16.mxu0 0
        %560 = vmatpush1.bf16.msra.mxu0 %v528
        %561 = vmatprep.subr.bf16.mxu0 0
        %562 = vmatpush1.bf16.msra.mxu0 %v529
        %563 = vmatprep.subr.bf16.mxu0 0
        %564 = vmatpush1.bf16.msra.mxu0 %v530
        %565 = vmatprep.subr.bf16.mxu0 0
        %566 = vmatpush1.bf16.msra.mxu0 %v531
        %567 = vmatprep.subr.bf16.mxu0 0
        %568 = vmatpush1.bf16.msra.mxu0 %v532
        %569 = vmatprep.subr.bf16.mxu0 0
        %570 = vmatpush1.bf16.msra.mxu0 %v533
        %571 = vmatprep.subr.bf16.mxu0 0
        %572 = vmatpush1.bf16.msra.mxu0 %v534
        %573 = vmatprep.subr.bf16.mxu0 0
        %574 = vmatpush1.bf16.msra.mxu0 %v535
        %575 = vmatprep.subr.bf16.mxu0 0
        %576 = vmatpush1.bf16.msra.mxu0 0
        %577 = vmatprep.subr.bf16.mxu0 0
        %578 = vmatpush1.bf16.msra.mxu0 0
        %579 = vmatprep.subr.bf16.mxu0 0
        %580 = vmatpush1.bf16.msra.mxu0 0
        %581 = vmatprep.subr.bf16.mxu0 0
        %582 = vmatpush1.bf16.msra.mxu0 0
        %583 = vmatprep.mubr.bf16.mxu0 %v549
        %584 = vmatmul.mubr.bf16.gmra.mrb[0].mxu0 %v450
        %v585 = vpop.f32.mrb[0].mxu0
        %v586 = vadd.f32 0.0, %v585
        %v587 = vpop.f32.mrb[0].mxu0
        %v588 = vpop.f32.mrb[0].mxu0
        %v589 = vadd.f32 0.0, %v588
        %v590 = vpop.f32.mrb[0].mxu0
        %591 = vdwg.mxu0
        %v592 = vld [vmem:[%s3] sm:$0x1]
        %v593 = vlaneseq
        %v594 = vshrl.u32 %v593, 7
        %v595 = vsub.s32 0, %v594
        %v596 = vrot.slane %v592, %v595
        %v597 = vmul.f32 %v586, %v596
        %v598 = vmul.f32 %v589, %v596
        %v599 = vld [vmem:[%s3 + $0x1] sm:$0x1]
        %v600 = vlaneseq
        %v601 = vshrl.u32 %v600, 7
        %v602 = vsub.s32 0, %v601
        %v603 = vrot.slane %v599, %v602
        %v604 = vadd.f32 %v597, %v603
        %v605 = vadd.f32 %v598, %v603
        %v606 = vmax.f32 %v604, 0.0
        %v607 = vmax.f32 %v605, 0.0
        %v608 = vpack.c.bf16 %v607, %v606
        %609 = vst [vmem:[#allocation3 + $0x8] sm:$0xff] %v608
        %610 = vmatprep.subr.bf16.mxu0 0
        %611 = vmatpush1.bf16.msra.mxu0 %v608
        %612 = vmatprep.subr.bf16.mxu0 0
        %613 = vmatpush1.bf16.msra.mxu0 0
        %614 = vmatprep.subr.bf16.mxu0 0
        %615 = vmatpush1.bf16.msra.mxu0 0
        %616 = vmatprep.subr.bf16.mxu0 0
        %617 = vmatpush1.bf16.msra.mxu0 0
        %618 = vmatprep.subr.bf16.mxu0 0
        %619 = vmatpush1.bf16.msra.mxu0 0
        %620 = vmatprep.subr.bf16.mxu0 0
        %621 = vmatpush1.bf16.msra.mxu0 0
        %622 = vmatprep.subr.bf16.mxu0 0
        %623 = vmatpush1.bf16.msra.mxu0 0
        %624 = vmatprep.subr.bf16.mxu0 0
        %625 = vmatpush1.bf16.msra.mxu0 0
        %626 = vmatprep.subr.bf16.mxu0 0
        %627 = vmatpush1.bf16.msra.mxu0 0
        %628 = vmatprep.subr.bf16.mxu0 0
        %629 = vmatpush1.bf16.msra.mxu0 0
        %630 = vmatprep.subr.bf16.mxu0 0
        %631 = vmatpush1.bf16.msra.mxu0 0
        %632 = vmatprep.subr.bf16.mxu0 0
        %633 = vmatpush1.bf16.msra.mxu0 0
        %634 = vmatprep.subr.bf16.mxu0 0
        %635 = vmatpush1.bf16.msra.mxu0 0
        %636 = vmatprep.subr.bf16.mxu0 0
        %637 = vmatpush1.bf16.msra.mxu0 0
        %638 = vmatprep.subr.bf16.mxu0 0
        %639 = vmatpush1.bf16.msra.mxu0 0
        %640 = vmatprep.subr.bf16.mxu0 0
        %641 = vmatpush1.bf16.msra.mxu0 0
        %642 = vmatprep.mubr.bf16.mxu0 0
        %643 = vmatmul.mubr.bf16.gmra.mrb[0].mxu0 %v358
        %v644 = vpop.f32.mrb[0].mxu0
        %v645 = vadd.f32 0.0, %v644
        %v646 = vpop.f32.mrb[0].mxu0
        %v647 = vpop.f32.mrb[0].mxu0
        %v648 = vadd.f32 0.0, %v647
        %v649 = vpop.f32.mrb[0].mxu0
        %650 = vdwg.mxu0
        %v651 = vpack.c.bf16 %v648, %v645
        %652 = vst [vmem:[#allocation3] sm:$0xff] %v651
        %653 = vmatprep.subr.bf16.mxu0 0
        %654 = vmatpush1.bf16.msra.mxu0 %v608
        %655 = vmatprep.subr.bf16.mxu0 0
        %656 = vmatpush1.bf16.msra.mxu0 0
        %657 = vmatprep.subr.bf16.mxu0 0
        %658 = vmatpush1.bf16.msra.mxu0 0
        %659 = vmatprep.subr.bf16.mxu0 0
        %660 = vmatpush1.bf16.msra.mxu0 0
        %661 = vmatprep.subr.bf16.mxu0 0
        %662 = vmatpush1.bf16.msra.mxu0 0
        %663 = vmatprep.subr.bf16.mxu0 0
        %664 = vmatpush1.bf16.msra.mxu0 0
        %665 = vmatprep.subr.bf16.mxu0 0
        %666 = vmatpush1.bf16.msra.mxu0 0
        %667 = vmatprep.subr.bf16.mxu0 0
        %668 = vmatpush1.bf16.msra.mxu0 0
        %669 = vmatprep.subr.bf16.mxu0 0
        %670 = vmatpush1.bf16.msra.mxu0 0
        %671 = vmatprep.subr.bf16.mxu0 0
        %672 = vmatpush1.bf16.msra.mxu0 0
        %673 = vmatprep.subr.bf16.mxu0 0
        %674 = vmatpush1.bf16.msra.mxu0 0
        %675 = vmatprep.subr.bf16.mxu0 0
        %676 = vmatpush1.bf16.msra.mxu0 0
        %677 = vmatprep.subr.bf16.mxu0 0
        %678 = vmatpush1.bf16.msra.mxu0 0
        %679 = vmatprep.subr.bf16.mxu0 0
        %680 = vmatpush1.bf16.msra.mxu0 0
        %681 = vmatprep.subr.bf16.mxu0 0
        %682 = vmatpush1.bf16.msra.mxu0 0
        %683 = vmatprep.subr.bf16.mxu0 0
        %684 = vmatpush1.bf16.msra.mxu0 0
        %685 = vmatprep.mubr.bf16.mxu0 0
        %686 = vmatmul.mubr.bf16.gmra.mrb[0].mxu0 %v405
        %v687 = vpop.f32.mrb[0].mxu0
        %v688 = vadd.f32 0.0, %v687
        %v689 = vpop.f32.mrb[0].mxu0
        %v690 = vpop.f32.mrb[0].mxu0
        %v691 = vadd.f32 0.0, %v690
        %v692 = vpop.f32.mrb[0].mxu0
        %693 = vdwg.mxu0
        %v694 = vpack.c.bf16 %v691, %v688
        %695 = vst [vmem:[#allocation3 + $0x10] sm:$0xff] %v694
        %v696 = vld [vmem:[#allocation3] sm:$0xff]
        %v697 = vld [vmem:[#allocation3 + $0x8] sm:$0xff]
        %v698 = vld [vmem:[#allocation3 + $0x10] sm:$0xff]
        %v699 = vld [vmem:[%s2] sm:$0xf]
        %v700 = vld [vmem:[%s2 + $0x4] sm:$0xf]
        %v701 = vld [vmem:[%s2 + $0x8] sm:$0xf]
        %v702 = vld [vmem:[%s2 + $0xc] sm:$0xf]
        %v703 = vld [vmem:[%s2 + $0x10] sm:$0xf]
        %v704 = vld [vmem:[%s2 + $0x14] sm:$0xf]
        %v705 = vld [vmem:[%s2 + $0x18] sm:$0xf]
        %v706 = vld [vmem:[%s2 + $0x1c] sm:$0xf]
        %v707 = vld [vmem:[%s2 + $0x20] sm:$0xf]
        %v708 = vld [vmem:[%s2 + $0x24] sm:$0xf]
        %v709 = vld [vmem:[%s2 + $0x28] sm:$0xf]
        %v710 = vld [vmem:[%s2 + $0x2c] sm:$0xf]
        %v711 = vld [vmem:[%s2 + $0x30] sm:$0xf]
        %v712 = vld [vmem:[%s2 + $0x34] sm:$0xf]
        %v713 = vld [vmem:[%s2 + $0x38] sm:$0xf]
        %v714 = vld [vmem:[%s2 + $0x3c] sm:$0xf]
        %v715 = vld [vmem:[%s2 + $0x40] sm:$0xf]
        %v716 = vld [vmem:[%s2 + $0x44] sm:$0xf]
        %v717 = vld [vmem:[%s2 + $0x48] sm:$0xf]
        %v718 = vld [vmem:[%s2 + $0x4c] sm:$0xf]
        %v719 = vld [vmem:[%s2 + $0x50] sm:$0xf]
        %v720 = vld [vmem:[%s2 + $0x54] sm:$0xf]
        %v721 = vld [vmem:[%s2 + $0x58] sm:$0xf]
        %v722 = vld [vmem:[%s2 + $0x5c] sm:$0xf]
        %v723 = vld [vmem:[%s2 + $0x60] sm:$0xf]
        %v724 = vld [vmem:[%s2 + $0x64] sm:$0xf]
        %v725 = vld [vmem:[%s2 + $0x68] sm:$0xf]
        %v726 = vld [vmem:[%s2 + $0x6c] sm:$0xf]
        %v727 = vld [vmem:[%s2 + $0x70] sm:$0xf]
        %v728 = vld [vmem:[%s2 + $0x74] sm:$0xf]
        %v729 = vld [vmem:[%s2 + $0x78] sm:$0xf]
        %v730 = vld [vmem:[%s2 + $0x7c] sm:$0xf]
        %v731 = vld [vmem:[%s2 + $0x80] sm:$0xf]
        %v732 = vld [vmem:[%s2 + $0x84] sm:$0xf]
        %v733 = vld [vmem:[%s2 + $0x88] sm:$0xf]
        %v734 = vld [vmem:[%s2 + $0x8c] sm:$0xf]
        %v735 = vld [vmem:[%s2 + $0x90] sm:$0xf]
        %v736 = vld [vmem:[%s2 + $0x94] sm:$0xf]
        %v737 = vld [vmem:[%s2 + $0x98] sm:$0xf]
        %v738 = vld [vmem:[%s2 + $0x9c] sm:$0xf]
        %v739 = vld [vmem:[%s2 + $0xa0] sm:$0xf]
        %v740 = vld [vmem:[%s2 + $0xa4] sm:$0xf]
        %v741 = vld [vmem:[%s2 + $0xa8] sm:$0xf]
        %v742 = vld [vmem:[%s2 + $0xac] sm:$0xf]
        %v743 = vld [vmem:[%s2 + $0xb0] sm:$0xf]
        %v744 = vld [vmem:[%s2 + $0xb4] sm:$0xf]
        %v745 = vld [vmem:[%s2 + $0xb8] sm:$0xf]
        %v746 = vld [vmem:[%s2 + $0xbc] sm:$0xf]
        %v795 = vunpack.c.l.b16 %v699
        %v796 = vunpack.c.l.b16 %v700
        %v797 = vunpack.c.l.b16 %v701
        %v798 = vunpack.c.l.b16 %v702
        %v799 = vunpack.c.l.b16 %v703
        %v800 = vunpack.c.l.b16 %v704
        %v801 = vunpack.c.l.b16 %v705
        %v802 = vunpack.c.l.b16 %v706
        %v803 = vunpack.c.l.b16 %v707
        %v804 = vunpack.c.l.b16 %v708
        %v805 = vunpack.c.l.b16 %v709
        %v806 = vunpack.c.l.b16 %v710
        %v807 = vunpack.c.l.b16 %v711
        %v808 = vunpack.c.l.b16 %v712
        %v809 = vunpack.c.l.b16 %v713
        %v810 = vunpack.c.l.b16 %v714
        %v811 = vunpack.c.l.b16 %v715
        %v812 = vunpack.c.l.b16 %v716
        %v813 = vunpack.c.l.b16 %v717
        %v814 = vunpack.c.l.b16 %v718
        %v815 = vunpack.c.l.b16 %v719
        %v816 = vunpack.c.l.b16 %v720
        %v817 = vunpack.c.l.b16 %v721
        %v818 = vunpack.c.l.b16 %v722
        %v819 = vunpack.c.l.b16 %v723
        %v820 = vunpack.c.l.b16 %v724
        %v821 = vunpack.c.l.b16 %v725
        %v822 = vunpack.c.l.b16 %v726
        %v823 = vunpack.c.l.b16 %v727
        %v824 = vunpack.c.l.b16 %v728
        %v825 = vunpack.c.l.b16 %v729
        %v826 = vunpack.c.l.b16 %v730
        %v827 = vunpack.c.l.b16 %v731
        %v828 = vunpack.c.l.b16 %v732
        %v829 = vunpack.c.l.b16 %v733
        %v830 = vunpack.c.l.b16 %v734
        %v831 = vunpack.c.l.b16 %v735
        %v832 = vunpack.c.l.b16 %v736
        %v833 = vunpack.c.l.b16 %v737
        %v834 = vunpack.c.l.b16 %v738
        %v835 = vunpack.c.l.b16 %v739
        %v836 = vunpack.c.l.b16 %v740
        %v837 = vunpack.c.l.b16 %v741
        %v838 = vunpack.c.l.b16 %v742
        %v839 = vunpack.c.l.b16 %v743
        %v840 = vunpack.c.l.b16 %v744
        %v841 = vunpack.c.l.b16 %v745
        %v842 = vunpack.c.l.b16 %v746
        %v843 = vpack.c.b16 %v796, %v795
        %v844 = vpack.c.b16 %v798, %v797
        %v845 = vpack.c.b16 %v800, %v799
        %v846 = vpack.c.b16 %v802, %v801
        %v847 = vpack.c.b16 %v804, %v803
        %v848 = vpack.c.b16 %v806, %v805
        %v849 = vpack.c.b16 %v808, %v807
        %v850 = vpack.c.b16 %v810, %v809
        %v851 = vpack.c.b16 %v812, %v811
        %v852 = vpack.c.b16 %v814, %v813
        %v853 = vpack.c.b16 %v816, %v815
        %v854 = vpack.c.b16 %v818, %v817
        %v855 = vpack.c.b16 %v820, %v819
        %v856 = vpack.c.b16 %v822, %v821
        %v857 = vpack.c.b16 %v824, %v823
        %v858 = vpack.c.b16 %v826, %v825
        %v859 = vpack.c.b16 %v828, %v827
        %v860 = vpack.c.b16 %v830, %v829
        %v861 = vpack.c.b16 %v832, %v831
        %v862 = vpack.c.b16 %v834, %v833
        %v863 = vpack.c.b16 %v836, %v835
        %v864 = vpack.c.b16 %v838, %v837
        %v865 = vpack.c.b16 %v840, %v839
        %v866 = vpack.c.b16 %v842, %v841
        %891 = vmatprep.subr.bf16.mxu0 0
        %892 = vmatpush1.bf16.msra.mxu0 %v843
        %893 = vmatprep.subr.bf16.mxu0 0
        %894 = vmatpush1.bf16.msra.mxu0 %v844
        %895 = vmatprep.subr.bf16.mxu0 0
        %896 = vmatpush1.bf16.msra.mxu0 %v845
        %897 = vmatprep.subr.bf16.mxu0 0
        %898 = vmatpush1.bf16.msra.mxu0 %v846
        %899 = vmatprep.subr.bf16.mxu0 0
        %900 = vmatpush1.bf16.msra.mxu0 %v847
        %901 = vmatprep.subr.bf16.mxu0 0
        %902 = vmatpush1.bf16.msra.mxu0 %v848
        %903 = vmatprep.subr.bf16.mxu0 0
        %904 = vmatpush1.bf16.msra.mxu0 %v849
        %905 = vmatprep.subr.bf16.mxu0 0
        %906 = vmatpush1.bf16.msra.mxu0 %v850
        %907 = vmatprep.subr.bf16.mxu0 0
        %908 = vmatpush1.bf16.msra.mxu0 %v851
        %909 = vmatprep.subr.bf16.mxu0 0
        %910 = vmatpush1.bf16.msra.mxu0 %v852
        %911 = vmatprep.subr.bf16.mxu0 0
        %912 = vmatpush1.bf16.msra.mxu0 %v853
        %913 = vmatprep.subr.bf16.mxu0 0
        %914 = vmatpush1.bf16.msra.mxu0 %v854
        %915 = vmatprep.subr.bf16.mxu0 0
        %916 = vmatpush1.bf16.msra.mxu0 %v855
        %917 = vmatprep.subr.bf16.mxu0 0
        %918 = vmatpush1.bf16.msra.mxu0 %v856
        %919 = vmatprep.subr.bf16.mxu0 0
        %920 = vmatpush1.bf16.msra.mxu0 %v857
        %921 = vmatprep.subr.bf16.mxu0 0
        %922 = vmatpush1.bf16.msra.mxu0 %v858
        %923 = vmatprep.mubr.bf16.mxu0 %v697
        %924 = vmatmul.mubr.bf16.gmra.mrb[0].mxu0 %v696
        %v925 = vpop.f32.mrb[0].mxu0
        %v926 = vadd.f32 0.0, %v925
        %v927 = vpop.f32.mrb[0].mxu0
        %v928 = vpop.f32.mrb[0].mxu0
        %v929 = vadd.f32 0.0, %v928
        %v930 = vpop.f32.mrb[0].mxu0
        %931 = vdwg.mxu0
        %932 = vmatprep.subr.bf16.mxu0 0
        %933 = vmatpush1.bf16.msra.mxu0 %v859
        %934 = vmatprep.subr.bf16.mxu0 0
        %935 = vmatpush1.bf16.msra.mxu0 %v860
        %936 = vmatprep.subr.bf16.mxu0 0
        %937 = vmatpush1.bf16.msra.mxu0 %v861
        %938 = vmatprep.subr.bf16.mxu0 0
        %939 = vmatpush1.bf16.msra.mxu0 %v862
        %940 = vmatprep.subr.bf16.mxu0 0
        %941 = vmatpush1.bf16.msra.mxu0 %v863
        %942 = vmatprep.subr.bf16.mxu0 0
        %943 = vmatpush1.bf16.msra.mxu0 %v864
        %944 = vmatprep.subr.bf16.mxu0 0
        %945 = vmatpush1.bf16.msra.mxu0 %v865
        %946 = vmatprep.subr.bf16.mxu0 0
        %947 = vmatpush1.bf16.msra.mxu0 %v866
        %948 = vmatprep.subr.bf16.mxu0 0
        %949 = vmatpush1.bf16.msra.mxu0 0
        %950 = vmatprep.subr.bf16.mxu0 0
        %951 = vmatpush1.bf16.msra.mxu0 0
        %952 = vmatprep.subr.bf16.mxu0 0
        %953 = vmatpush1.bf16.msra.mxu0 0
        %954 = vmatprep.subr.bf16.mxu0 0
        %955 = vmatpush1.bf16.msra.mxu0 0
        %956 = vmatprep.subr.bf16.mxu0 0
        %957 = vmatpush1.bf16.msra.mxu0 0
        %958 = vmatprep.subr.bf16.mxu0 0
        %959 = vmatpush1.bf16.msra.mxu0 0
        %960 = vmatprep.subr.bf16.mxu0 0
        %961 = vmatpush1.bf16.msra.mxu0 0
        %962 = vmatprep.subr.bf16.mxu0 0
        %963 = vmatpush1.bf16.msra.mxu0 0
        %964 = vmatprep.mubr.bf16.mxu0 0
        %965 = vmatmul.mubr.bf16.gmra.mrb[0].mxu0 %v698
        %v966 = vpop.f32.mrb[0].mxu0
        %v967 = vadd.f32 %v926, %v966
        %v968 = vpop.f32.mrb[0].mxu0
        %v969 = vpop.f32.mrb[0].mxu0
        %v970 = vadd.f32 %v929, %v969
        %v971 = vpop.f32.mrb[0].mxu0
        %972 = vdwg.mxu0
        %v973 = vld [vmem:[%s4] sm:$0x1]
        %v974 = vlaneseq
        %v975 = vshrl.u32 %v974, 7
        %v976 = vsub.s32 0, %v975
        %v977 = vrot.slane %v973, %v976
        %v978 = vmul.f32 %v967, %v977
        %v979 = vmul.f32 %v970, %v977
        %v980 = vld [vmem:[%s4 + $0x1] sm:$0x1]
        %v981 = vlaneseq
        %v982 = vshrl.u32 %v981, 7
        %v983 = vsub.s32 0, %v982
        %v984 = vrot.slane %v980, %v983
        %v985 = vadd.f32 %v978, %v984
        %v986 = vadd.f32 %v979, %v984
        %v987 = vmax.f32 %v985, 0.0
        %v988 = vmax.f32 %v986, 0.0
        %989 = vst.msk [vmem:[%s275] sm:$0xff] %vm356, %v987
        %990 = vst.msk [vmem:[%s275 + $0x8] sm:$0xff] %vm356, %v988
        %993 = vrot.lane.b32.xlu0 %v987, 112
        %v994 = vpop.permute.xlu0 %993
        %995 = vrot.lane.b32.xlu0 %v988, 112
        %v996 = vpop.permute.xlu0 %995
        %s999 = scalar_lea.vmem %s275, 16 [#allocation4]
        %1000 = vst.msk [vmem:[%s999] sm:$0xff] %vm356, %v994
        %1001 = vst.msk [vmem:[%s999 + $0x8] sm:$0xff] %vm356, %v996
        %1002 = vrot.lane.b32.xlu0 %v987, 96
        %v1003 = vpop.permute.xlu0 %1002
        %1004 = vrot.lane.b32.xlu0 %v988, 96
        %v1005 = vpop.permute.xlu0 %1004
        %s1008 = scalar_lea.vmem %s275, 32 [#allocation4]
        %1009 = vst.msk [vmem:[%s1008] sm:$0xff] %vm356, %v1003
        %1010 = vst.msk [vmem:[%s1008 + $0x8] sm:$0xff] %vm356, %v1005
        %1011 = vrot.lane.b32.xlu0 %v987, 80
        %v1012 = vpop.permute.xlu0 %1011
        %1013 = vrot.lane.b32.xlu0 %v988, 80
        %v1014 = vpop.permute.xlu0 %1013
        %s1017 = scalar_lea.vmem %s275, 48 [#allocation4]
        %1018 = vst.msk [vmem:[%s1017] sm:$0xff] %vm356, %v1012
        %1019 = vst.msk [vmem:[%s1017 + $0x8] sm:$0xff] %vm356, %v1014
        %1020 = vrot.lane.b32.xlu0 %v987, 64
        %v1021 = vpop.permute.xlu0 %1020
        %1022 = vrot.lane.b32.xlu0 %v988, 64
        %v1023 = vpop.permute.xlu0 %1022
        %s1026 = scalar_lea.vmem %s275, 64 [#allocation4]
        %1027 = vst.msk [vmem:[%s1026] sm:$0xff] %vm356, %v1021
        %1028 = vst.msk [vmem:[%s1026 + $0x8] sm:$0xff] %vm356, %v1023
        %1029 = vrot.lane.b32.xlu0 %v987, 48
        %v1030 = vpop.permute.xlu0 %1029
        %1031 = vrot.lane.b32.xlu0 %v988, 48
        %v1032 = vpop.permute.xlu0 %1031
        %s1035 = scalar_lea.vmem %s275, 80 [#allocation4]
        %1036 = vst.msk [vmem:[%s1035] sm:$0xff] %vm356, %v1030
        %1037 = vst.msk [vmem:[%s1035 + $0x8] sm:$0xff] %vm356, %v1032
        %1038 = vrot.lane.b32.xlu0 %v987, 32
        %v1039 = vpop.permute.xlu0 %1038
        %1040 = vrot.lane.b32.xlu0 %v988, 32
        %v1041 = vpop.permute.xlu0 %1040
        %s1044 = scalar_lea.vmem %s275, 96 [#allocation4]
        %1045 = vst.msk [vmem:[%s1044] sm:$0xff] %vm356, %v1039
        %1046 = vst.msk [vmem:[%s1044 + $0x8] sm:$0xff] %vm356, %v1041
        %1047 = vrot.lane.b32.xlu0 %v987, 16
        %v1048 = vpop.permute.xlu0 %1047
        %1049 = vrot.lane.b32.xlu0 %v988, 16
        %v1050 = vpop.permute.xlu0 %1049
        %s1053 = scalar_lea.vmem %s275, 112 [#allocation4]
        %1054 = vst.msk [vmem:[%s1053] sm:$0xff] %vm356, %v1048
        %1055 = vst.msk [vmem:[%s1053 + $0x8] sm:$0xff] %vm356, %v1050
        %v1056 = vcombine.high %v987, %v987
        %v1058 = vunpack.c.l.s4 1983009808
        %v1059 = vunpack.c.0.s8 %v1058
        %v1060 = vlaneseq
        %v1061 = vshrl.u32 %v1060, 7
        %v1062 = vsub.s32 %v1059, %v1061
        %v1063 = vrot.slane %v987, %v1062
        %v1065 = vunpack.c.l.s4 1983009808
        %v1066 = vunpack.c.0.s8 %v1065
        %v1067 = vlaneseq
        %v1068 = vshrl.u32 %v1067, 7
        %v1069 = vsub.s32 %v1066, %v1068
        %v1070 = vrot.slane %v1056, %v1069
        %v1071 = vcombine.high %v1063, %v1063
        %v1072 = vcombine.high %v1070, %v1070
        %v1073 = vcombine.high %v988, %v988
        %v1075 = vunpack.c.l.s4 1983009808
        %v1076 = vunpack.c.0.s8 %v1075
        %v1077 = vlaneseq
        %v1078 = vshrl.u32 %v1077, 7
        %v1079 = vsub.s32 %v1076, %v1078
        %v1080 = vrot.slane %v988, %v1079
        %v1082 = vunpack.c.l.s4 1983009808
        %v1083 = vunpack.c.0.s8 %v1082
        %v1084 = vlaneseq
        %v1085 = vshrl.u32 %v1084, 7
        %v1086 = vsub.s32 %v1083, %v1085
        %v1087 = vrot.slane %v1073, %v1086
        %v1088 = vcombine.high %v1080, %v1080
        %v1089 = vcombine.high %v1087, %v1087
        %vm1098 = vcmask 1041408
        %v1099 = vsel %vm1098, %v1063, -inf
        %v1100 = vrot.slane %v1099, 4
        %v1101 = vmax.f32 %v1099, %v1100
        %v1102 = vrot.slane %v1101, 2
        %v1103 = vmax.f32 %v1101, %v1102
        %v1104 = vrot.slane %v1103, 1
        %v1105 = vmax.f32 %v1103, %v1104
        %v1106 = vsel %vm1098, %v1071, -inf
        %v1107 = vrot.slane %v1106, 4
        %v1108 = vmax.f32 %v1106, %v1107
        %v1109 = vrot.slane %v1108, 2
        %v1110 = vmax.f32 %v1108, %v1109
        %v1111 = vrot.slane %v1110, 1
        %v1112 = vmax.f32 %v1110, %v1111
        %v1113 = vsel %vm1098, %v1070, -inf
        %v1114 = vrot.slane %v1113, 4
        %v1115 = vmax.f32 %v1113, %v1114
        %v1116 = vrot.slane %v1115, 2
        %v1117 = vmax.f32 %v1115, %v1116
        %v1118 = vrot.slane %v1117, 1
        %v1119 = vmax.f32 %v1117, %v1118
        %v1120 = vsel %vm1098, %v1072, -inf
        %v1121 = vrot.slane %v1120, 4
        %v1122 = vmax.f32 %v1120, %v1121
        %v1123 = vrot.slane %v1122, 2
        %v1124 = vmax.f32 %v1122, %v1123
        %v1125 = vrot.slane %v1124, 1
        %v1126 = vmax.f32 %v1124, %v1125
        %v1127 = vsel %vm1098, %v1080, -inf
        %v1128 = vrot.slane %v1127, 4
        %v1129 = vmax.f32 %v1127, %v1128
        %v1130 = vrot.slane %v1129, 2
        %v1131 = vmax.f32 %v1129, %v1130
        %v1132 = vrot.slane %v1131, 1
        %v1133 = vmax.f32 %v1131, %v1132
        %v1134 = vsel %vm1098, %v1088, -inf
        %v1135 = vrot.slane %v1134, 4
        %v1136 = vmax.f32 %v1134, %v1135
        %v1137 = vrot.slane %v1136, 2
        %v1138 = vmax.f32 %v1136, %v1137
        %v1139 = vrot.slane %v1138, 1
        %v1140 = vmax.f32 %v1138, %v1139
        %v1141 = vsel %vm1098, %v1087, -inf
        %v1142 = vrot.slane %v1141, 4
        %v1143 = vmax.f32 %v1141, %v1142
        %v1144 = vrot.slane %v1143, 2
        %v1145 = vmax.f32 %v1143, %v1144
        %v1146 = vrot.slane %v1145, 1
        %v1147 = vmax.f32 %v1145, %v1146
        %v1148 = vsel %vm1098, %v1089, -inf
        %v1149 = vrot.slane %v1148, 4
        %v1150 = vmax.f32 %v1148, %v1149
        %v1151 = vrot.slane %v1150, 2
        %v1152 = vmax.f32 %v1150, %v1151
        %v1153 = vrot.slane %v1152, 1
        %v1154 = vmax.f32 %v1152, %v1153
        %v1155 = vld [vmem:[%s5] sm:$0xff]
        %v1156 = vld [vmem:[%s5 + $0x8] sm:$0xff]
        %v1157 = vld [vmem:[%s5 + $0x10] sm:$0xff]
        %v1158 = vld [vmem:[%s5 + $0x18] sm:$0xff]
        %v1159 = vld [vmem:[%s5 + $0x20] sm:$0xff]
        %v1160 = vld [vmem:[%s5 + $0x28] sm:$0xff]
        %v1161 = vld [vmem:[%s5 + $0x30] sm:$0xff]
        %v1162 = vld [vmem:[%s5 + $0x38] sm:$0xff]
        %v1163 = vld [vmem:[%s5 + $0x40] sm:$0xff]
        %v1164 = vld [vmem:[%s5 + $0x48] sm:$0xff]
        %v1165 = vld [vmem:[%s5 + $0x50] sm:$0xff]
        %v1166 = vld [vmem:[%s5 + $0x58] sm:$0xff]
        %v1167 = vld [vmem:[%s5 + $0x60] sm:$0xff]
        %v1168 = vld [vmem:[%s5 + $0x68] sm:$0xff]
        %v1169 = vld [vmem:[%s5 + $0x70] sm:$0xff]
        %v1170 = vld [vmem:[%s5 + $0x78] sm:$0xff]
        %vm1179 = vcmask 1041409
        %v1180 = vsel %vm1179, %v1112, %v1105
        %vm1181 = vcmask 1042434
        %v1182 = vsel %vm1181, %v1119, %v1180
        %vm1183 = vcmask 1043459
        %v1184 = vsel %vm1183, %v1126, %v1182
        %vm1185 = vcmask 1044484
        %v1186 = vsel %vm1185, %v1133, %v1184
        %vm1187 = vcmask 1045509
        %v1188 = vsel %vm1187, %v1140, %v1186
        %vm1189 = vcmask 1046534
        %v1190 = vsel %vm1189, %v1147, %v1188
        %vm1191 = vcmask 1047559
        %v1192 = vsel %vm1191, %v1154, %v1190
        %1194 = vmatprep.subr.mxu0 0.0
        %v1195 = vand.u32 %v1155, 4294901760
        %1196 = vmatpush1.msra.mxu0 %v1195
        %1197 = vmatprep.subr.mxu0 0.0
        %v1198 = vand.u32 %v1156, 4294901760
        %1199 = vmatpush1.msra.mxu0 %v1198
        %1200 = vmatprep.subr.mxu0 0.0
        %v1201 = vand.u32 %v1157, 4294901760
        %1202 = vmatpush1.msra.mxu0 %v1201
        %1203 = vmatprep.subr.mxu0 0.0
        %v1204 = vand.u32 %v1158, 4294901760
        %1205 = vmatpush1.msra.mxu0 %v1204
        %1206 = vmatprep.subr.mxu0 0.0
        %v1207 = vand.u32 %v1159, 4294901760
        %1208 = vmatpush1.msra.mxu0 %v1207
        %1209 = vmatprep.subr.mxu0 0.0
        %v1210 = vand.u32 %v1160, 4294901760
        %1211 = vmatpush1.msra.mxu0 %v1210
        %1212 = vmatprep.subr.mxu0 0.0
        %v1213 = vand.u32 %v1161, 4294901760
        %1214 = vmatpush1.msra.mxu0 %v1213
        %1215 = vmatprep.subr.mxu0 0.0
        %v1216 = vand.u32 %v1162, 4294901760
        %1217 = vmatpush1.msra.mxu0 %v1216
        %1218 = vmatprep.subr.mxu0 0.0
        %v1219 = vand.u32 %v1163, 4294901760
        %1220 = vmatpush1.msra.mxu0 %v1219
        %1221 = vmatprep.subr.mxu0 0.0
        %v1222 = vand.u32 %v1164, 4294901760
        %1223 = vmatpush1.msra.mxu0 %v1222
        %1224 = vmatprep.subr.mxu0 0.0
        %v1225 = vand.u32 %v1165, 4294901760
        %1226 = vmatpush1.msra.mxu0 %v1225
        %1227 = vmatprep.subr.mxu0 0.0
        %v1228 = vand.u32 %v1166, 4294901760
        %1229 = vmatpush1.msra.mxu0 %v1228
        %1230 = vmatprep.subr.mxu0 0.0
        %v1231 = vand.u32 %v1167, 4294901760
        %1232 = vmatpush1.msra.mxu0 %v1231
        %1233 = vmatprep.subr.mxu0 0.0
        %v1234 = vand.u32 %v1168, 4294901760
        %1235 = vmatpush1.msra.mxu0 %v1234
        %1236 = vmatprep.subr.mxu0 0.0
        %v1237 = vand.u32 %v1169, 4294901760
        %1238 = vmatpush1.msra.mxu0 %v1237
        %1239 = vmatprep.subr.mxu0 0.0
        %v1240 = vand.u32 %v1170, 4294901760
        %1241 = vmatpush1.msra.mxu0 %v1240
        %1242 = vmatprep.subr.mxu0 0.0
        %1243 = vmatpush1.msra.mxu0 0.0
        %1244 = vmatprep.subr.mxu0 0.0
        %1245 = vmatpush1.msra.mxu0 0.0
        %1246 = vmatprep.subr.mxu0 0.0
        %1247 = vmatpush1.msra.mxu0 0.0
        %1248 = vmatprep.subr.mxu0 0.0
        %1249 = vmatpush1.msra.mxu0 0.0
        %1250 = vmatprep.subr.mxu0 0.0
        %1251 = vmatpush1.msra.mxu0 0.0
        %1252 = vmatprep.subr.mxu0 0.0
        %1253 = vmatpush1.msra.mxu0 0.0
        %1254 = vmatprep.subr.mxu0 0.0
        %1255 = vmatpush1.msra.mxu0 0.0
        %1256 = vmatprep.subr.mxu0 0.0
        %1257 = vmatpush1.msra.mxu0 0.0
        %1258 = vmatprep.subr.mxu0 0.0
        %1259 = vmatpush1.msra.mxu0 0.0
        %1260 = vmatprep.subr.mxu0 0.0
        %1261 = vmatpush1.msra.mxu0 0.0
        %1262 = vmatprep.subr.mxu0 0.0
        %1263 = vmatpush1.msra.mxu0 0.0
        %1264 = vmatprep.subr.mxu0 0.0
        %1265 = vmatpush1.msra.mxu0 0.0
        %1266 = vmatprep.subr.mxu0 0.0
        %1267 = vmatpush1.msra.mxu0 0.0
        %1268 = vmatprep.subr.mxu0 0.0
        %1269 = vmatpush1.msra.mxu0 0.0
        %1270 = vmatprep.subr.mxu0 0.0
        %1271 = vmatpush1.msra.mxu0 0.0
        %1272 = vmatprep.subr.mxu0 0.0
        %1273 = vmatpush1.msra.mxu0 0.0
        %1274 = vmatprep.mubr.f32.mxu0 0.0
        %v1275 = vand.u32 %v1192, 4294901760
        %v1276 = vsub.f32 %v1192, %v1275
        %v1277 = vand.u32 %v1276, 4294901760
        %v1278 = vsub.f32 %v1276, %v1277
        %v1279 = vand.u32 %v1278, 4294901760
        %1280 = vmatmul.mubr.f32.gmra.mrb[0].mxu0 %v1279
        %v1281 = vpop.f32.mrb[0].mxu0
        %v1282 = vadd.f32 0.0, %v1281
        %v1283 = vpop.f32.mrb[0].mxu0
        %1284 = vdwg.mxu0
        %1285 = vmatprep.subr.mxu0 0.0
        %v1286 = vand.u32 %v1155, 4294901760
        %v1287 = vsub.f32 %v1155, %v1286
        %v1288 = vand.u32 %v1287, 4294901760
        %v1289 = vsub.f32 %v1287, %v1288
        %v1290 = vand.u32 %v1289, 4294901760
        %1291 = vmatpush1.msra.mxu0 %v1290
        %1292 = vmatprep.subr.mxu0 0.0
        %v1293 = vand.u32 %v1156, 4294901760
        %v1294 = vsub.f32 %v1156, %v1293
        %v1295 = vand.u32 %v1294, 4294901760
        %v1296 = vsub.f32 %v1294, %v1295
        %v1297 = vand.u32 %v1296, 4294901760
        %1298 = vmatpush1.msra.mxu0 %v1297
        %1299 = vmatprep.subr.mxu0 0.0
        %v1300 = vand.u32 %v1157, 4294901760
        %v1301 = vsub.f32 %v1157, %v1300
        %v1302 = vand.u32 %v1301, 4294901760
        %v1303 = vsub.f32 %v1301, %v1302
        %v1304 = vand.u32 %v1303, 4294901760
        %1305 = vmatpush1.msra.mxu0 %v1304
        %1306 = vmatprep.subr.mxu0 0.0
        %v1307 = vand.u32 %v1158, 4294901760
        %v1308 = vsub.f32 %v1158, %v1307
        %v1309 = vand.u32 %v1308, 4294901760
        %v1310 = vsub.f32 %v1308, %v1309
        %v1311 = vand.u32 %v1310, 4294901760
        %1312 = vmatpush1.msra.mxu0 %v1311
        %1313 = vmatprep.subr.mxu0 0.0
        %v1314 = vand.u32 %v1159, 4294901760
        %v1315 = vsub.f32 %v1159, %v1314
        %v1316 = vand.u32 %v1315, 4294901760
        %v1317 = vsub.f32 %v1315, %v1316
        %v1318 = vand.u32 %v1317, 4294901760
        %1319 = vmatpush1.msra.mxu0 %v1318
        %1320 = vmatprep.subr.mxu0 0.0
        %v1321 = vand.u32 %v1160, 4294901760
        %v1322 = vsub.f32 %v1160, %v1321
        %v1323 = vand.u32 %v1322, 4294901760
        %v1324 = vsub.f32 %v1322, %v1323
        %v1325 = vand.u32 %v1324, 4294901760
        %1326 = vmatpush1.msra.mxu0 %v1325
        %1327 = vmatprep.subr.mxu0 0.0
        %v1328 = vand.u32 %v1161, 4294901760
        %v1329 = vsub.f32 %v1161, %v1328
        %v1330 = vand.u32 %v1329, 4294901760
        %v1331 = vsub.f32 %v1329, %v1330
        %v1332 = vand.u32 %v1331, 4294901760
        %1333 = vmatpush1.msra.mxu0 %v1332
        %1334 = vmatprep.subr.mxu0 0.0
        %v1335 = vand.u32 %v1162, 4294901760
        %v1336 = vsub.f32 %v1162, %v1335
        %v1337 = vand.u32 %v1336, 4294901760
        %v1338 = vsub.f32 %v1336, %v1337
        %v1339 = vand.u32 %v1338, 4294901760
        %1340 = vmatpush1.msra.mxu0 %v1339
        %1341 = vmatprep.subr.mxu0 0.0
        %v1342 = vand.u32 %v1163, 4294901760
        %v1343 = vsub.f32 %v1163, %v1342
        %v1344 = vand.u32 %v1343, 4294901760
        %v1345 = vsub.f32 %v1343, %v1344
        %v1346 = vand.u32 %v1345, 4294901760
        %1347 = vmatpush1.msra.mxu0 %v1346
        %1348 = vmatprep.subr.mxu0 0.0
        %v1349 = vand.u32 %v1164, 4294901760
        %v1350 = vsub.f32 %v1164, %v1349
        %v1351 = vand.u32 %v1350, 4294901760
        %v1352 = vsub.f32 %v1350, %v1351
        %v1353 = vand.u32 %v1352, 4294901760
        %1354 = vmatpush1.msra.mxu0 %v1353
        %1355 = vmatprep.subr.mxu0 0.0
        %v1356 = vand.u32 %v1165, 4294901760
        %v1357 = vsub.f32 %v1165, %v1356
        %v1358 = vand.u32 %v1357, 4294901760
        %v1359 = vsub.f32 %v1357, %v1358
        %v1360 = vand.u32 %v1359, 4294901760
        %1361 = vmatpush1.msra.mxu0 %v1360
        %1362 = vmatprep.subr.mxu0 0.0
        %v1363 = vand.u32 %v1166, 4294901760
        %v1364 = vsub.f32 %v1166, %v1363
        %v1365 = vand.u32 %v1364, 4294901760
        %v1366 = vsub.f32 %v1364, %v1365
        %v1367 = vand.u32 %v1366, 4294901760
        %1368 = vmatpush1.msra.mxu0 %v1367
        %1369 = vmatprep.subr.mxu0 0.0
        %v1370 = vand.u32 %v1167, 4294901760
        %v1371 = vsub.f32 %v1167, %v1370
        %v1372 = vand.u32 %v1371, 4294901760
        %v1373 = vsub.f32 %v1371, %v1372
        %v1374 = vand.u32 %v1373, 4294901760
        %1375 = vmatpush1.msra.mxu0 %v1374
        %1376 = vmatprep.subr.mxu0 0.0
        %v1377 = vand.u32 %v1168, 4294901760
        %v1378 = vsub.f32 %v1168, %v1377
        %v1379 = vand.u32 %v1378, 4294901760
        %v1380 = vsub.f32 %v1378, %v1379
        %v1381 = vand.u32 %v1380, 4294901760
        %1382 = vmatpush1.msra.mxu0 %v1381
        %1383 = vmatprep.subr.mxu0 0.0
        %v1384 = vand.u32 %v1169, 4294901760
        %v1385 = vsub.f32 %v1169, %v1384
        %v1386 = vand.u32 %v1385, 4294901760
        %v1387 = vsub.f32 %v1385, %v1386
        %v1388 = vand.u32 %v1387, 4294901760
        %1389 = vmatpush1.msra.mxu0 %v1388
        %1390 = vmatprep.subr.mxu0 0.0
        %v1391 = vand.u32 %v1170, 4294901760
        %v1392 = vsub.f32 %v1170, %v1391
        %v1393 = vand.u32 %v1392, 4294901760
        %v1394 = vsub.f32 %v1392, %v1393
        %v1395 = vand.u32 %v1394, 4294901760
        %1396 = vmatpush1.msra.mxu0 %v1395
        %1397 = vmatprep.subr.mxu0 0.0
        %1398 = vmatpush1.msra.mxu0 0.0
        %1399 = vmatprep.subr.mxu0 0.0
        %1400 = vmatpush1.msra.mxu0 0.0
        %1401 = vmatprep.subr.mxu0 0.0
        %1402 = vmatpush1.msra.mxu0 0.0
        %1403 = vmatprep.subr.mxu0 0.0
        %1404 = vmatpush1.msra.mxu0 0.0
        %1405 = vmatprep.subr.mxu0 0.0
        %1406 = vmatpush1.msra.mxu0 0.0
        %1407 = vmatprep.subr.mxu0 0.0
        %1408 = vmatpush1.msra.mxu0 0.0
        %1409 = vmatprep.subr.mxu0 0.0
        %1410 = vmatpush1.msra.mxu0 0.0
        %1411 = vmatprep.subr.mxu0 0.0
        %1412 = vmatpush1.msra.mxu0 0.0
        %1413 = vmatprep.subr.mxu0 0.0
        %1414 = vmatpush1.msra.mxu0 0.0
        %1415 = vmatprep.subr.mxu0 0.0
        %1416 = vmatpush1.msra.mxu0 0.0
        %1417 = vmatprep.subr.mxu0 0.0
        %1418 = vmatpush1.msra.mxu0 0.0
        %1419 = vmatprep.subr.mxu0 0.0
        %1420 = vmatpush1.msra.mxu0 0.0
        %1421 = vmatprep.subr.mxu0 0.0
        %1422 = vmatpush1.msra.mxu0 0.0
        %1423 = vmatprep.subr.mxu0 0.0
        %1424 = vmatpush1.msra.mxu0 0.0
        %1425 = vmatprep.subr.mxu0 0.0
        %1426 = vmatpush1.msra.mxu0 0.0
        %1427 = vmatprep.subr.mxu0 0.0
        %1428 = vmatpush1.msra.mxu0 0.0
        %1429 = vmatprep.mubr.f32.mxu0 0.0
        %v1430 = vand.u32 %v1192, 4294901760
        %1431 = vmatmul.mubr.f32.gmra.mrb[0].mxu0 %v1430
        %v1432 = vpop.f32.mrb[0].mxu0
        %v1433 = vadd.f32 %v1282, %v1432
        %v1434 = vpop.f32.mrb[0].mxu0
        %1435 = vdwg.mxu0
        %1436 = vmatprep.subr.mxu0 0.0
        %v1437 = vand.u32 %v1155, 4294901760
        %v1438 = vsub.f32 %v1155, %v1437
        %1439 = vmatpush1.msra.mxu0 %v1438
        %1440 = vmatprep.subr.mxu0 0.0
        %v1441 = vand.u32 %v1156, 4294901760
        %v1442 = vsub.f32 %v1156, %v1441
        %1443 = vmatpush1.msra.mxu0 %v1442
        %1444 = vmatprep.subr.mxu0 0.0
        %v1445 = vand.u32 %v1157, 4294901760
        %v1446 = vsub.f32 %v1157, %v1445
        %1447 = vmatpush1.msra.mxu0 %v1446
        %1448 = vmatprep.subr.mxu0 0.0
        %v1449 = vand.u32 %v1158, 4294901760
        %v1450 = vsub.f32 %v1158, %v1449
        %1451 = vmatpush1.msra.mxu0 %v1450
        %1452 = vmatprep.subr.mxu0 0.0
        %v1453 = vand.u32 %v1159, 4294901760
        %v1454 = vsub.f32 %v1159, %v1453
        %1455 = vmatpush1.msra.mxu0 %v1454
        %1456 = vmatprep.subr.mxu0 0.0
        %v1457 = vand.u32 %v1160, 4294901760
        %v1458 = vsub.f32 %v1160, %v1457
        %1459 = vmatpush1.msra.mxu0 %v1458
        %1460 = vmatprep.subr.mxu0 0.0
        %v1461 = vand.u32 %v1161, 4294901760
        %v1462 = vsub.f32 %v1161, %v1461
        %1463 = vmatpush1.msra.mxu0 %v1462
        %1464 = vmatprep.subr.mxu0 0.0
        %v1465 = vand.u32 %v1162, 4294901760
        %v1466 = vsub.f32 %v1162, %v1465
        %1467 = vmatpush1.msra.mxu0 %v1466
        %1468 = vmatprep.subr.mxu0 0.0
        %v1469 = vand.u32 %v1163, 4294901760
        %v1470 = vsub.f32 %v1163, %v1469
        %1471 = vmatpush1.msra.mxu0 %v1470
        %1472 = vmatprep.subr.mxu0 0.0
        %v1473 = vand.u32 %v1164, 4294901760
        %v1474 = vsub.f32 %v1164, %v1473
        %1475 = vmatpush1.msra.mxu0 %v1474
        %1476 = vmatprep.subr.mxu0 0.0
        %v1477 = vand.u32 %v1165, 4294901760
        %v1478 = vsub.f32 %v1165, %v1477
        %1479 = vmatpush1.msra.mxu0 %v1478
        %1480 = vmatprep.subr.mxu0 0.0
        %v1481 = vand.u32 %v1166, 4294901760
        %v1482 = vsub.f32 %v1166, %v1481
        %1483 = vmatpush1.msra.mxu0 %v1482
        %1484 = vmatprep.subr.mxu0 0.0
        %v1485 = vand.u32 %v1167, 4294901760
        %v1486 = vsub.f32 %v1167, %v1485
        %1487 = vmatpush1.msra.mxu0 %v1486
        %1488 = vmatprep.subr.mxu0 0.0
        %v1489 = vand.u32 %v1168, 4294901760
        %v1490 = vsub.f32 %v1168, %v1489
        %1491 = vmatpush1.msra.mxu0 %v1490
        %1492 = vmatprep.subr.mxu0 0.0
        %v1493 = vand.u32 %v1169, 4294901760
        %v1494 = vsub.f32 %v1169, %v1493
        %1495 = vmatpush1.msra.mxu0 %v1494
        %1496 = vmatprep.subr.mxu0 0.0
        %v1497 = vand.u32 %v1170, 4294901760
        %v1498 = vsub.f32 %v1170, %v1497
        %1499 = vmatpush1.msra.mxu0 %v1498
        %1500 = vmatprep.subr.mxu0 0.0
        %1501 = vmatpush1.msra.mxu0 0.0
        %1502 = vmatprep.subr.mxu0 0.0
        %1503 = vmatpush1.msra.mxu0 0.0
        %1504 = vmatprep.subr.mxu0 0.0
        %1505 = vmatpush1.msra.mxu0 0.0
        %1506 = vmatprep.subr.mxu0 0.0
        %1507 = vmatpush1.msra.mxu0 0.0
        %1508 = vmatprep.subr.mxu0 0.0
        %1509 = vmatpush1.msra.mxu0 0.0
        %1510 = vmatprep.subr.mxu0 0.0
        %1511 = vmatpush1.msra.mxu0 0.0
        %1512 = vmatprep.subr.mxu0 0.0
        %1513 = vmatpush1.msra.mxu0 0.0
        %1514 = vmatprep.subr.mxu0 0.0
        %1515 = vmatpush1.msra.mxu0 0.0
        %1516 = vmatprep.subr.mxu0 0.0
        %1517 = vmatpush1.msra.mxu0 0.0
        %1518 = vmatprep.subr.mxu0 0.0
        %1519 = vmatpush1.msra.mxu0 0.0
        %1520 = vmatprep.subr.mxu0 0.0
        %1521 = vmatpush1.msra.mxu0 0.0
        %1522 = vmatprep.subr.mxu0 0.0
        %1523 = vmatpush1.msra.mxu0 0.0
        %1524 = vmatprep.subr.mxu0 0.0
        %1525 = vmatpush1.msra.mxu0 0.0
        %1526 = vmatprep.subr.mxu0 0.0
        %1527 = vmatpush1.msra.mxu0 0.0
        %1528 = vmatprep.subr.mxu0 0.0
        %1529 = vmatpush1.msra.mxu0 0.0
        %1530 = vmatprep.subr.mxu0 0.0
        %1531 = vmatpush1.msra.mxu0 0.0
        %1532 = vmatprep.mubr.f32.mxu0 0.0
        %v1533 = vand.u32 %v1192, 4294901760
        %v1534 = vsub.f32 %v1192, %v1533
        %1535 = vmatmul.mubr.f32.gmra.mrb[0].mxu0 %v1534
        %v1536 = vpop.f32.mrb[0].mxu0
        %v1537 = vadd.f32 %v1433, %v1536
        %v1538 = vpop.f32.mrb[0].mxu0
        %1539 = vdwg.mxu0
        %1540 = vmatprep.subr.mxu0 0.0
        %v1541 = vand.u32 %v1155, 4294901760
        %1542 = vmatpush1.msra.mxu0 %v1541
        %1543 = vmatprep.subr.mxu0 0.0
        %v1544 = vand.u32 %v1156, 4294901760
        %1545 = vmatpush1.msra.mxu0 %v1544
        %1546 = vmatprep.subr.mxu0 0.0
        %v1547 = vand.u32 %v1157, 4294901760
        %1548 = vmatpush1.msra.mxu0 %v1547
        %1549 = vmatprep.subr.mxu0 0.0
        %v1550 = vand.u32 %v1158, 4294901760
        %1551 = vmatpush1.msra.mxu0 %v1550
        %1552 = vmatprep.subr.mxu0 0.0
        %v1553 = vand.u32 %v1159, 4294901760
        %1554 = vmatpush1.msra.mxu0 %v1553
        %1555 = vmatprep.subr.mxu0 0.0
        %v1556 = vand.u32 %v1160, 4294901760
        %1557 = vmatpush1.msra.mxu0 %v1556
        %1558 = vmatprep.subr.mxu0 0.0
        %v1559 = vand.u32 %v1161, 4294901760
        %1560 = vmatpush1.msra.mxu0 %v1559
        %1561 = vmatprep.subr.mxu0 0.0
        %v1562 = vand.u32 %v1162, 4294901760
        %1563 = vmatpush1.msra.mxu0 %v1562
        %1564 = vmatprep.subr.mxu0 0.0
        %v1565 = vand.u32 %v1163, 4294901760
        %1566 = vmatpush1.msra.mxu0 %v1565
        %1567 = vmatprep.subr.mxu0 0.0
        %v1568 = vand.u32 %v1164, 4294901760
        %1569 = vmatpush1.msra.mxu0 %v1568
        %1570 = vmatprep.subr.mxu0 0.0
        %v1571 = vand.u32 %v1165, 4294901760
        %1572 = vmatpush1.msra.mxu0 %v1571
        %1573 = vmatprep.subr.mxu0 0.0
        %v1574 = vand.u32 %v1166, 4294901760
        %1575 = vmatpush1.msra.mxu0 %v1574
        %1576 = vmatprep.subr.mxu0 0.0
        %v1577 = vand.u32 %v1167, 4294901760
        %1578 = vmatpush1.msra.mxu0 %v1577
        %1579 = vmatprep.subr.mxu0 0.0
        %v1580 = vand.u32 %v1168, 4294901760
        %1581 = vmatpush1.msra.mxu0 %v1580
        %1582 = vmatprep.subr.mxu0 0.0
        %v1583 = vand.u32 %v1169, 4294901760
        %1584 = vmatpush1.msra.mxu0 %v1583
        %1585 = vmatprep.subr.mxu0 0.0
        %v1586 = vand.u32 %v1170, 4294901760
        %1587 = vmatpush1.msra.mxu0 %v1586
        %1588 = vmatprep.subr.mxu0 0.0
        %1589 = vmatpush1.msra.mxu0 0.0
        %1590 = vmatprep.subr.mxu0 0.0
        %1591 = vmatpush1.msra.mxu0 0.0
        %1592 = vmatprep.subr.mxu0 0.0
        %1593 = vmatpush1.msra.mxu0 0.0
        %1594 = vmatprep.subr.mxu0 0.0
        %1595 = vmatpush1.msra.mxu0 0.0
        %1596 = vmatprep.subr.mxu0 0.0
        %1597 = vmatpush1.msra.mxu0 0.0
        %1598 = vmatprep.subr.mxu0 0.0
        %1599 = vmatpush1.msra.mxu0 0.0
        %1600 = vmatprep.subr.mxu0 0.0
        %1601 = vmatpush1.msra.mxu0 0.0
        %1602 = vmatprep.subr.mxu0 0.0
        %1603 = vmatpush1.msra.mxu0 0.0
        %1604 = vmatprep.subr.mxu0 0.0
        %1605 = vmatpush1.msra.mxu0 0.0
        %1606 = vmatprep.subr.mxu0 0.0
        %1607 = vmatpush1.msra.mxu0 0.0
        %1608 = vmatprep.subr.mxu0 0.0
        %1609 = vmatpush1.msra.mxu0 0.0
        %1610 = vmatprep.subr.mxu0 0.0
        %1611 = vmatpush1.msra.mxu0 0.0
        %1612 = vmatprep.subr.mxu0 0.0
        %1613 = vmatpush1.msra.mxu0 0.0
        %1614 = vmatprep.subr.mxu0 0.0
        %1615 = vmatpush1.msra.mxu0 0.0
        %1616 = vmatprep.subr.mxu0 0.0
        %1617 = vmatpush1.msra.mxu0 0.0
        %1618 = vmatprep.subr.mxu0 0.0
        %1619 = vmatpush1.msra.mxu0 0.0
        %1620 = vmatprep.mubr.f32.mxu0 0.0
        %v1621 = vand.u32 %v1192, 4294901760
        %v1622 = vsub.f32 %v1192, %v1621
        %v1623 = vand.u32 %v1622, 4294901760
        %1624 = vmatmul.mubr.f32.gmra.mrb[0].mxu0 %v1623
        %v1625 = vpop.f32.mrb[0].mxu0
        %v1626 = vadd.f32 %v1537, %v1625
        %v1627 = vpop.f32.mrb[0].mxu0
        %1628 = vdwg.mxu0
        %1629 = vmatprep.subr.mxu0 0.0
        %v1630 = vand.u32 %v1155, 4294901760
        %v1631 = vsub.f32 %v1155, %v1630
        %v1632 = vand.u32 %v1631, 4294901760
        %1633 = vmatpush1.msra.mxu0 %v1632
        %1634 = vmatprep.subr.mxu0 0.0
        %v1635 = vand.u32 %v1156, 4294901760
        %v1636 = vsub.f32 %v1156, %v1635
        %v1637 = vand.u32 %v1636, 4294901760
        %1638 = vmatpush1.msra.mxu0 %v1637
        %1639 = vmatprep.subr.mxu0 0.0
        %v1640 = vand.u32 %v1157, 4294901760
        %v1641 = vsub.f32 %v1157, %v1640
        %v1642 = vand.u32 %v1641, 4294901760
        %1643 = vmatpush1.msra.mxu0 %v1642
        %1644 = vmatprep.subr.mxu0 0.0
        %v1645 = vand.u32 %v1158, 4294901760
        %v1646 = vsub.f32 %v1158, %v1645
        %v1647 = vand.u32 %v1646, 4294901760
        %1648 = vmatpush1.msra.mxu0 %v1647
        %1649 = vmatprep.subr.mxu0 0.0
        %v1650 = vand.u32 %v1159, 4294901760
        %v1651 = vsub.f32 %v1159, %v1650
        %v1652 = vand.u32 %v1651, 4294901760
        %1653 = vmatpush1.msra.mxu0 %v1652
        %1654 = vmatprep.subr.mxu0 0.0
        %v1655 = vand.u32 %v1160, 4294901760
        %v1656 = vsub.f32 %v1160, %v1655
        %v1657 = vand.u32 %v1656, 4294901760
        %1658 = vmatpush1.msra.mxu0 %v1657
        %1659 = vmatprep.subr.mxu0 0.0
        %v1660 = vand.u32 %v1161, 4294901760
        %v1661 = vsub.f32 %v1161, %v1660
        %v1662 = vand.u32 %v1661, 4294901760
        %1663 = vmatpush1.msra.mxu0 %v1662
        %1664 = vmatprep.subr.mxu0 0.0
        %v1665 = vand.u32 %v1162, 4294901760
        %v1666 = vsub.f32 %v1162, %v1665
        %v1667 = vand.u32 %v1666, 4294901760
        %1668 = vmatpush1.msra.mxu0 %v1667
        %1669 = vmatprep.subr.mxu0 0.0
        %v1670 = vand.u32 %v1163, 4294901760
        %v1671 = vsub.f32 %v1163, %v1670
        %v1672 = vand.u32 %v1671, 4294901760
        %1673 = vmatpush1.msra.mxu0 %v1672
        %1674 = vmatprep.subr.mxu0 0.0
        %v1675 = vand.u32 %v1164, 4294901760
        %v1676 = vsub.f32 %v1164, %v1675
        %v1677 = vand.u32 %v1676, 4294901760
        %1678 = vmatpush1.msra.mxu0 %v1677
        %1679 = vmatprep.subr.mxu0 0.0
        %v1680 = vand.u32 %v1165, 4294901760
        %v1681 = vsub.f32 %v1165, %v1680
        %v1682 = vand.u32 %v1681, 4294901760
        %1683 = vmatpush1.msra.mxu0 %v1682
        %1684 = vmatprep.subr.mxu0 0.0
        %v1685 = vand.u32 %v1166, 4294901760
        %v1686 = vsub.f32 %v1166, %v1685
        %v1687 = vand.u32 %v1686, 4294901760
        %1688 = vmatpush1.msra.mxu0 %v1687
        %1689 = vmatprep.subr.mxu0 0.0
        %v1690 = vand.u32 %v1167, 4294901760
        %v1691 = vsub.f32 %v1167, %v1690
        %v1692 = vand.u32 %v1691, 4294901760
        %1693 = vmatpush1.msra.mxu0 %v1692
        %1694 = vmatprep.subr.mxu0 0.0
        %v1695 = vand.u32 %v1168, 4294901760
        %v1696 = vsub.f32 %v1168, %v1695
        %v1697 = vand.u32 %v1696, 4294901760
        %1698 = vmatpush1.msra.mxu0 %v1697
        %1699 = vmatprep.subr.mxu0 0.0
        %v1700 = vand.u32 %v1169, 4294901760
        %v1701 = vsub.f32 %v1169, %v1700
        %v1702 = vand.u32 %v1701, 4294901760
        %1703 = vmatpush1.msra.mxu0 %v1702
        %1704 = vmatprep.subr.mxu0 0.0
        %v1705 = vand.u32 %v1170, 4294901760
        %v1706 = vsub.f32 %v1170, %v1705
        %v1707 = vand.u32 %v1706, 4294901760
        %1708 = vmatpush1.msra.mxu0 %v1707
        %1709 = vmatprep.subr.mxu0 0.0
        %1710 = vmatpush1.msra.mxu0 0.0
        %1711 = vmatprep.subr.mxu0 0.0
        %1712 = vmatpush1.msra.mxu0 0.0
        %1713 = vmatprep.subr.mxu0 0.0
        %1714 = vmatpush1.msra.mxu0 0.0
        %1715 = vmatprep.subr.mxu0 0.0
        %1716 = vmatpush1.msra.mxu0 0.0
        %1717 = vmatprep.subr.mxu0 0.0
        %1718 = vmatpush1.msra.mxu0 0.0
        %1719 = vmatprep.subr.mxu0 0.0
        %1720 = vmatpush1.msra.mxu0 0.0
        %1721 = vmatprep.subr.mxu0 0.0
        %1722 = vmatpush1.msra.mxu0 0.0
        %1723 = vmatprep.subr.mxu0 0.0
        %1724 = vmatpush1.msra.mxu0 0.0
        %1725 = vmatprep.subr.mxu0 0.0
        %1726 = vmatpush1.msra.mxu0 0.0
        %1727 = vmatprep.subr.mxu0 0.0
        %1728 = vmatpush1.msra.mxu0 0.0
        %1729 = vmatprep.subr.mxu0 0.0
        %1730 = vmatpush1.msra.mxu0 0.0
        %1731 = vmatprep.subr.mxu0 0.0
        %1732 = vmatpush1.msra.mxu0 0.0
        %1733 = vmatprep.subr.mxu0 0.0
        %1734 = vmatpush1.msra.mxu0 0.0
        %1735 = vmatprep.subr.mxu0 0.0
        %1736 = vmatpush1.msra.mxu0 0.0
        %1737 = vmatprep.subr.mxu0 0.0
        %1738 = vmatpush1.msra.mxu0 0.0
        %1739 = vmatprep.subr.mxu0 0.0
        %1740 = vmatpush1.msra.mxu0 0.0
        %1741 = vmatprep.mubr.f32.mxu0 0.0
        %v1742 = vand.u32 %v1192, 4294901760
        %1743 = vmatmul.mubr.f32.gmra.mrb[0].mxu0 %v1742
        %v1744 = vpop.f32.mrb[0].mxu0
        %v1745 = vadd.f32 %v1626, %v1744
        %v1746 = vpop.f32.mrb[0].mxu0
        %1747 = vdwg.mxu0
        %1748 = vmatprep.subr.mxu0 0.0
        %v1749 = vand.u32 %v1155, 4294901760
        %1750 = vmatpush1.msra.mxu0 %v1749
        %1751 = vmatprep.subr.mxu0 0.0
        %v1752 = vand.u32 %v1156, 4294901760
        %1753 = vmatpush1.msra.mxu0 %v1752
        %1754 = vmatprep.subr.mxu0 0.0
        %v1755 = vand.u32 %v1157, 4294901760
        %1756 = vmatpush1.msra.mxu0 %v1755
        %1757 = vmatprep.subr.mxu0 0.0
        %v1758 = vand.u32 %v1158, 4294901760
        %1759 = vmatpush1.msra.mxu0 %v1758
        %1760 = vmatprep.subr.mxu0 0.0
        %v1761 = vand.u32 %v1159, 4294901760
        %1762 = vmatpush1.msra.mxu0 %v1761
        %1763 = vmatprep.subr.mxu0 0.0
        %v1764 = vand.u32 %v1160, 4294901760
        %1765 = vmatpush1.msra.mxu0 %v1764
        %1766 = vmatprep.subr.mxu0 0.0
        %v1767 = vand.u32 %v1161, 4294901760
        %1768 = vmatpush1.msra.mxu0 %v1767
        %1769 = vmatprep.subr.mxu0 0.0
        %v1770 = vand.u32 %v1162, 4294901760
        %1771 = vmatpush1.msra.mxu0 %v1770
        %1772 = vmatprep.subr.mxu0 0.0
        %v1773 = vand.u32 %v1163, 4294901760
        %1774 = vmatpush1.msra.mxu0 %v1773
        %1775 = vmatprep.subr.mxu0 0.0
        %v1776 = vand.u32 %v1164, 4294901760
        %1777 = vmatpush1.msra.mxu0 %v1776
        %1778 = vmatprep.subr.mxu0 0.0
        %v1779 = vand.u32 %v1165, 4294901760
        %1780 = vmatpush1.msra.mxu0 %v1779
        %1781 = vmatprep.subr.mxu0 0.0
        %v1782 = vand.u32 %v1166, 4294901760
        %1783 = vmatpush1.msra.mxu0 %v1782
        %1784 = vmatprep.subr.mxu0 0.0
        %v1785 = vand.u32 %v1167, 4294901760
        %1786 = vmatpush1.msra.mxu0 %v1785
        %1787 = vmatprep.subr.mxu0 0.0
        %v1788 = vand.u32 %v1168, 4294901760
        %1789 = vmatpush1.msra.mxu0 %v1788
        %1790 = vmatprep.subr.mxu0 0.0
        %v1791 = vand.u32 %v1169, 4294901760
        %1792 = vmatpush1.msra.mxu0 %v1791
        %1793 = vmatprep.subr.mxu0 0.0
        %v1794 = vand.u32 %v1170, 4294901760
        %1795 = vmatpush1.msra.mxu0 %v1794
        %1796 = vmatprep.subr.mxu0 0.0
        %1797 = vmatpush1.msra.mxu0 0.0
        %1798 = vmatprep.subr.mxu0 0.0
        %1799 = vmatpush1.msra.mxu0 0.0
        %1800 = vmatprep.subr.mxu0 0.0
        %1801 = vmatpush1.msra.mxu0 0.0
        %1802 = vmatprep.subr.mxu0 0.0
        %1803 = vmatpush1.msra.mxu0 0.0
        %1804 = vmatprep.subr.mxu0 0.0
        %1805 = vmatpush1.msra.mxu0 0.0
        %1806 = vmatprep.subr.mxu0 0.0
        %1807 = vmatpush1.msra.mxu0 0.0
        %1808 = vmatprep.subr.mxu0 0.0
        %1809 = vmatpush1.msra.mxu0 0.0
        %1810 = vmatprep.subr.mxu0 0.0
        %1811 = vmatpush1.msra.mxu0 0.0
        %1812 = vmatprep.subr.mxu0 0.0
        %1813 = vmatpush1.msra.mxu0 0.0
        %1814 = vmatprep.subr.mxu0 0.0
        %1815 = vmatpush1.msra.mxu0 0.0
        %1816 = vmatprep.subr.mxu0 0.0
        %1817 = vmatpush1.msra.mxu0 0.0
        %1818 = vmatprep.subr.mxu0 0.0
        %1819 = vmatpush1.msra.mxu0 0.0
        %1820 = vmatprep.subr.mxu0 0.0
        %1821 = vmatpush1.msra.mxu0 0.0
        %1822 = vmatprep.subr.mxu0 0.0
        %1823 = vmatpush1.msra.mxu0 0.0
        %1824 = vmatprep.subr.mxu0 0.0
        %1825 = vmatpush1.msra.mxu0 0.0
        %1826 = vmatprep.subr.mxu0 0.0
        %1827 = vmatpush1.msra.mxu0 0.0
        %1828 = vmatprep.mubr.f32.mxu0 0.0
        %v1829 = vand.u32 %v1192, 4294901760
        %1830 = vmatmul.mubr.f32.gmra.mrb[0].mxu0 %v1829
        %v1831 = vpop.f32.mrb[0].mxu0
        %v1832 = vadd.f32 %v1745, %v1831
        %v1833 = vpop.f32.mrb[0].mxu0
        %1834 = vdwg.mxu0
        %s1835 = scalar_lea.vmem %s5, 128
        %v1836 = vld [vmem:[%s1835] sm:$0xff]
        %v1837 = vld [vmem:[%s1835 + $0x8] sm:$0xff]
        %v1838 = vld [vmem:[%s1835 + $0x10] sm:$0xff]
        %v1839 = vld [vmem:[%s1835 + $0x18] sm:$0xff]
        %v1840 = vld [vmem:[%s1835 + $0x20] sm:$0xff]
        %v1841 = vld [vmem:[%s1835 + $0x28] sm:$0xff]
        %v1842 = vld [vmem:[%s1835 + $0x30] sm:$0xff]
        %v1843 = vld [vmem:[%s1835 + $0x38] sm:$0xff]
        %v1844 = vld [vmem:[%s1835 + $0x40] sm:$0xff]
        %v1845 = vld [vmem:[%s1835 + $0x48] sm:$0xff]
        %v1846 = vld [vmem:[%s1835 + $0x50] sm:$0xff]
        %v1847 = vld [vmem:[%s1835 + $0x58] sm:$0xff]
        %v1848 = vld [vmem:[%s1835 + $0x60] sm:$0xff]
        %v1849 = vld [vmem:[%s1835 + $0x68] sm:$0xff]
        %v1850 = vld [vmem:[%s1835 + $0x70] sm:$0xff]
        %v1851 = vld [vmem:[%s1835 + $0x78] sm:$0xff]
        %1852 = vmatprep.subr.mxu0 0.0
        %v1853 = vand.u32 %v1836, 4294901760
        %1854 = vmatpush1.msra.mxu0 %v1853
        %1855 = vmatprep.subr.mxu0 0.0
        %v1856 = vand.u32 %v1837, 4294901760
        %1857 = vmatpush1.msra.mxu0 %v1856
        %1858 = vmatprep.subr.mxu0 0.0
        %v1859 = vand.u32 %v1838, 4294901760
        %1860 = vmatpush1.msra.mxu0 %v1859
        %1861 = vmatprep.subr.mxu0 0.0
        %v1862 = vand.u32 %v1839, 4294901760
        %1863 = vmatpush1.msra.mxu0 %v1862
        %1864 = vmatprep.subr.mxu0 0.0
        %v1865 = vand.u32 %v1840, 4294901760
        %1866 = vmatpush1.msra.mxu0 %v1865
        %1867 = vmatprep.subr.mxu0 0.0
        %v1868 = vand.u32 %v1841, 4294901760
        %1869 = vmatpush1.msra.mxu0 %v1868
        %1870 = vmatprep.subr.mxu0 0.0
        %v1871 = vand.u32 %v1842, 4294901760
        %1872 = vmatpush1.msra.mxu0 %v1871
        %1873 = vmatprep.subr.mxu0 0.0
        %v1874 = vand.u32 %v1843, 4294901760
        %1875 = vmatpush1.msra.mxu0 %v1874
        %1876 = vmatprep.subr.mxu0 0.0
        %v1877 = vand.u32 %v1844, 4294901760
        %1878 = vmatpush1.msra.mxu0 %v1877
        %1879 = vmatprep.subr.mxu0 0.0
        %v1880 = vand.u32 %v1845, 4294901760
        %1881 = vmatpush1.msra.mxu0 %v1880
        %1882 = vmatprep.subr.mxu0 0.0
        %v1883 = vand.u32 %v1846, 4294901760
        %1884 = vmatpush1.msra.mxu0 %v1883
        %1885 = vmatprep.subr.mxu0 0.0
        %v1886 = vand.u32 %v1847, 4294901760
        %1887 = vmatpush1.msra.mxu0 %v1886
        %1888 = vmatprep.subr.mxu0 0.0
        %v1889 = vand.u32 %v1848, 4294901760
        %1890 = vmatpush1.msra.mxu0 %v1889
        %1891 = vmatprep.subr.mxu0 0.0
        %v1892 = vand.u32 %v1849, 4294901760
        %1893 = vmatpush1.msra.mxu0 %v1892
        %1894 = vmatprep.subr.mxu0 0.0
        %v1895 = vand.u32 %v1850, 4294901760
        %1896 = vmatpush1.msra.mxu0 %v1895
        %1897 = vmatprep.subr.mxu0 0.0
        %v1898 = vand.u32 %v1851, 4294901760
        %1899 = vmatpush1.msra.mxu0 %v1898
        %1900 = vmatprep.subr.mxu0 0.0
        %1901 = vmatpush1.msra.mxu0 0.0
        %1902 = vmatprep.subr.mxu0 0.0
        %1903 = vmatpush1.msra.mxu0 0.0
        %1904 = vmatprep.subr.mxu0 0.0
        %1905 = vmatpush1.msra.mxu0 0.0
        %1906 = vmatprep.subr.mxu0 0.0
        %1907 = vmatpush1.msra.mxu0 0.0
        %1908 = vmatprep.subr.mxu0 0.0
        %1909 = vmatpush1.msra.mxu0 0.0
        %1910 = vmatprep.subr.mxu0 0.0
        %1911 = vmatpush1.msra.mxu0 0.0
        %1912 = vmatprep.subr.mxu0 0.0
        %1913 = vmatpush1.msra.mxu0 0.0
        %1914 = vmatprep.subr.mxu0 0.0
        %1915 = vmatpush1.msra.mxu0 0.0
        %1916 = vmatprep.subr.mxu0 0.0
        %1917 = vmatpush1.msra.mxu0 0.0
        %1918 = vmatprep.subr.mxu0 0.0
        %1919 = vmatpush1.msra.mxu0 0.0
        %1920 = vmatprep.subr.mxu0 0.0
        %1921 = vmatpush1.msra.mxu0 0.0
        %1922 = vmatprep.subr.mxu0 0.0
        %1923 = vmatpush1.msra.mxu0 0.0
        %1924 = vmatprep.subr.mxu0 0.0
        %1925 = vmatpush1.msra.mxu0 0.0
        %1926 = vmatprep.subr.mxu0 0.0
        %1927 = vmatpush1.msra.mxu0 0.0
        %1928 = vmatprep.subr.mxu0 0.0
        %1929 = vmatpush1.msra.mxu0 0.0
        %1930 = vmatprep.subr.mxu0 0.0
        %1931 = vmatpush1.msra.mxu0 0.0
        %1932 = vmatprep.mubr.f32.mxu0 0.0
        %v1933 = vand.u32 %v1192, 4294901760
        %v1934 = vsub.f32 %v1192, %v1933
        %v1935 = vand.u32 %v1934, 4294901760
        %v1936 = vsub.f32 %v1934, %v1935
        %v1937 = vand.u32 %v1936, 4294901760
        %1938 = vmatmul.mubr.f32.gmra.mrb[0].mxu0 %v1937
        %v1939 = vpop.f32.mrb[0].mxu0
        %v1940 = vadd.f32 0.0, %v1939
        %v1941 = vpop.f32.mrb[0].mxu0
        %1942 = vdwg.mxu0
        %1943 = vmatprep.subr.mxu0 0.0
        %v1944 = vand.u32 %v1836, 4294901760
        %v1945 = vsub.f32 %v1836, %v1944
        %v1946 = vand.u32 %v1945, 4294901760
        %v1947 = vsub.f32 %v1945, %v1946
        %v1948 = vand.u32 %v1947, 4294901760
        %1949 = vmatpush1.msra.mxu0 %v1948
        %1950 = vmatprep.subr.mxu0 0.0
        %v1951 = vand.u32 %v1837, 4294901760
        %v1952 = vsub.f32 %v1837, %v1951
        %v1953 = vand.u32 %v1952, 4294901760
        %v1954 = vsub.f32 %v1952, %v1953
        %v1955 = vand.u32 %v1954, 4294901760
        %1956 = vmatpush1.msra.mxu0 %v1955
        %1957 = vmatprep.subr.mxu0 0.0
        %v1958 = vand.u32 %v1838, 4294901760
        %v1959 = vsub.f32 %v1838, %v1958
        %v1960 = vand.u32 %v1959, 4294901760
        %v1961 = vsub.f32 %v1959, %v1960
        %v1962 = vand.u32 %v1961, 4294901760
        %1963 = vmatpush1.msra.mxu0 %v1962
        %1964 = vmatprep.subr.mxu0 0.0
        %v1965 = vand.u32 %v1839, 4294901760
        %v1966 = vsub.f32 %v1839, %v1965
        %v1967 = vand.u32 %v1966, 4294901760
        %v1968 = vsub.f32 %v1966, %v1967
        %v1969 = vand.u32 %v1968, 4294901760
        %1970 = vmatpush1.msra.mxu0 %v1969
        %1971 = vmatprep.subr.mxu0 0.0
        %v1972 = vand.u32 %v1840, 4294901760
        %v1973 = vsub.f32 %v1840, %v1972
        %v1974 = vand.u32 %v1973, 4294901760
        %v1975 = vsub.f32 %v1973, %v1974
        %v1976 = vand.u32 %v1975, 4294901760
        %1977 = vmatpush1.msra.mxu0 %v1976
        %1978 = vmatprep.subr.mxu0 0.0
        %v1979 = vand.u32 %v1841, 4294901760
        %v1980 = vsub.f32 %v1841, %v1979
        %v1981 = vand.u32 %v1980, 4294901760
        %v1982 = vsub.f32 %v1980, %v1981
        %v1983 = vand.u32 %v1982, 4294901760
        %1984 = vmatpush1.msra.mxu0 %v1983
        %1985 = vmatprep.subr.mxu0 0.0
        %v1986 = vand.u32 %v1842, 4294901760
        %v1987 = vsub.f32 %v1842, %v1986
        %v1988 = vand.u32 %v1987, 4294901760
        %v1989 = vsub.f32 %v1987, %v1988
        %v1990 = vand.u32 %v1989, 4294901760
        %1991 = vmatpush1.msra.mxu0 %v1990
        %1992 = vmatprep.subr.mxu0 0.0
        %v1993 = vand.u32 %v1843, 4294901760
        %v1994 = vsub.f32 %v1843, %v1993
        %v1995 = vand.u32 %v1994, 4294901760
        %v1996 = vsub.f32 %v1994, %v1995
        %v1997 = vand.u32 %v1996, 4294901760
        %1998 = vmatpush1.msra.mxu0 %v1997
        %1999 = vmatprep.subr.mxu0 0.0
        %v2000 = vand.u32 %v1844, 4294901760
        %v2001 = vsub.f32 %v1844, %v2000
        %v2002 = vand.u32 %v2001, 4294901760
        %v2003 = vsub.f32 %v2001, %v2002
        %v2004 = vand.u32 %v2003, 4294901760
        %2005 = vmatpush1.msra.mxu0 %v2004
        %2006 = vmatprep.subr.mxu0 0.0
        %v2007 = vand.u32 %v1845, 4294901760
        %v2008 = vsub.f32 %v1845, %v2007
        %v2009 = vand.u32 %v2008, 4294901760
        %v2010 = vsub.f32 %v2008, %v2009
        %v2011 = vand.u32 %v2010, 4294901760
        %2012 = vmatpush1.msra.mxu0 %v2011
        %2013 = vmatprep.subr.mxu0 0.0
        %v2014 = vand.u32 %v1846, 4294901760
        %v2015 = vsub.f32 %v1846, %v2014
        %v2016 = vand.u32 %v2015, 4294901760
        %v2017 = vsub.f32 %v2015, %v2016
        %v2018 = vand.u32 %v2017, 4294901760
        %2019 = vmatpush1.msra.mxu0 %v2018
        %2020 = vmatprep.subr.mxu0 0.0
        %v2021 = vand.u32 %v1847, 4294901760
        %v2022 = vsub.f32 %v1847, %v2021
        %v2023 = vand.u32 %v2022, 4294901760
        %v2024 = vsub.f32 %v2022, %v2023
        %v2025 = vand.u32 %v2024, 4294901760
        %2026 = vmatpush1.msra.mxu0 %v2025
        %2027 = vmatprep.subr.mxu0 0.0
        %v2028 = vand.u32 %v1848, 4294901760
        %v2029 = vsub.f32 %v1848, %v2028
        %v2030 = vand.u32 %v2029, 4294901760
        %v2031 = vsub.f32 %v2029, %v2030
        %v2032 = vand.u32 %v2031, 4294901760
        %2033 = vmatpush1.msra.mxu0 %v2032
        %2034 = vmatprep.subr.mxu0 0.0
        %v2035 = vand.u32 %v1849, 4294901760
        %v2036 = vsub.f32 %v1849, %v2035
        %v2037 = vand.u32 %v2036, 4294901760
        %v2038 = vsub.f32 %v2036, %v2037
        %v2039 = vand.u32 %v2038, 4294901760
        %2040 = vmatpush1.msra.mxu0 %v2039
        %2041 = vmatprep.subr.mxu0 0.0
        %v2042 = vand.u32 %v1850, 4294901760
        %v2043 = vsub.f32 %v1850, %v2042
        %v2044 = vand.u32 %v2043, 4294901760
        %v2045 = vsub.f32 %v2043, %v2044
        %v2046 = vand.u32 %v2045, 4294901760
        %2047 = vmatpush1.msra.mxu0 %v2046
        %2048 = vmatprep.subr.mxu0 0.0
        %v2049 = vand.u32 %v1851, 4294901760
        %v2050 = vsub.f32 %v1851, %v2049
        %v2051 = vand.u32 %v2050, 4294901760
        %v2052 = vsub.f32 %v2050, %v2051
        %v2053 = vand.u32 %v2052, 4294901760
        %2054 = vmatpush1.msra.mxu0 %v2053
        %2055 = vmatprep.subr.mxu0 0.0
        %2056 = vmatpush1.msra.mxu0 0.0
        %2057 = vmatprep.subr.mxu0 0.0
        %2058 = vmatpush1.msra.mxu0 0.0
        %2059 = vmatprep.subr.mxu0 0.0
        %2060 = vmatpush1.msra.mxu0 0.0
        %2061 = vmatprep.subr.mxu0 0.0
        %2062 = vmatpush1.msra.mxu0 0.0
        %2063 = vmatprep.subr.mxu0 0.0
        %2064 = vmatpush1.msra.mxu0 0.0
        %2065 = vmatprep.subr.mxu0 0.0
        %2066 = vmatpush1.msra.mxu0 0.0
        %2067 = vmatprep.subr.mxu0 0.0
        %2068 = vmatpush1.msra.mxu0 0.0
        %2069 = vmatprep.subr.mxu0 0.0
        %2070 = vmatpush1.msra.mxu0 0.0
        %2071 = vmatprep.subr.mxu0 0.0
        %2072 = vmatpush1.msra.mxu0 0.0
        %2073 = vmatprep.subr.mxu0 0.0
        %2074 = vmatpush1.msra.mxu0 0.0
        %2075 = vmatprep.subr.mxu0 0.0
        %2076 = vmatpush1.msra.mxu0 0.0
        %2077 = vmatprep.subr.mxu0 0.0
        %2078 = vmatpush1.msra.mxu0 0.0
        %2079 = vmatprep.subr.mxu0 0.0
        %2080 = vmatpush1.msra.mxu0 0.0
        %2081 = vmatprep.subr.mxu0 0.0
        %2082 = vmatpush1.msra.mxu0 0.0
        %2083 = vmatprep.subr.mxu0 0.0
        %2084 = vmatpush1.msra.mxu0 0.0
        %2085 = vmatprep.subr.mxu0 0.0
        %2086 = vmatpush1.msra.mxu0 0.0
        %2087 = vmatprep.mubr.f32.mxu0 0.0
        %v2088 = vand.u32 %v1192, 4294901760
        %2089 = vmatmul.mubr.f32.gmra.mrb[0].mxu0 %v2088
        %v2090 = vpop.f32.mrb[0].mxu0
        %v2091 = vadd.f32 %v1940, %v2090
        %v2092 = vpop.f32.mrb[0].mxu0
        %2093 = vdwg.mxu0
        %2094 = vmatprep.subr.mxu0 0.0
        %v2095 = vand.u32 %v1836, 4294901760
        %v2096 = vsub.f32 %v1836, %v2095
        %2097 = vmatpush1.msra.mxu0 %v2096
        %2098 = vmatprep.subr.mxu0 0.0
        %v2099 = vand.u32 %v1837, 4294901760
        %v2100 = vsub.f32 %v1837, %v2099
        %2101 = vmatpush1.msra.mxu0 %v2100
        %2102 = vmatprep.subr.mxu0 0.0
        %v2103 = vand.u32 %v1838, 4294901760
        %v2104 = vsub.f32 %v1838, %v2103
        %2105 = vmatpush1.msra.mxu0 %v2104
        %2106 = vmatprep.subr.mxu0 0.0
        %v2107 = vand.u32 %v1839, 4294901760
        %v2108 = vsub.f32 %v1839, %v2107
        %2109 = vmatpush1.msra.mxu0 %v2108
        %2110 = vmatprep.subr.mxu0 0.0
        %v2111 = vand.u32 %v1840, 4294901760
        %v2112 = vsub.f32 %v1840, %v2111
        %2113 = vmatpush1.msra.mxu0 %v2112
        %2114 = vmatprep.subr.mxu0 0.0
        %v2115 = vand.u32 %v1841, 4294901760
        %v2116 = vsub.f32 %v1841, %v2115
        %2117 = vmatpush1.msra.mxu0 %v2116
        %2118 = vmatprep.subr.mxu0 0.0
        %v2119 = vand.u32 %v1842, 4294901760
        %v2120 = vsub.f32 %v1842, %v2119
        %2121 = vmatpush1.msra.mxu0 %v2120
        %2122 = vmatprep.subr.mxu0 0.0
        %v2123 = vand.u32 %v1843, 4294901760
        %v2124 = vsub.f32 %v1843, %v2123
        %2125 = vmatpush1.msra.mxu0 %v2124
        %2126 = vmatprep.subr.mxu0 0.0
        %v2127 = vand.u32 %v1844, 4294901760
        %v2128 = vsub.f32 %v1844, %v2127
        %2129 = vmatpush1.msra.mxu0 %v2128
        %2130 = vmatprep.subr.mxu0 0.0
        %v2131 = vand.u32 %v1845, 4294901760
        %v2132 = vsub.f32 %v1845, %v2131
        %2133 = vmatpush1.msra.mxu0 %v2132
        %2134 = vmatprep.subr.mxu0 0.0
        %v2135 = vand.u32 %v1846, 4294901760
        %v2136 = vsub.f32 %v1846, %v2135
        %2137 = vmatpush1.msra.mxu0 %v2136
        %2138 = vmatprep.subr.mxu0 0.0
        %v2139 = vand.u32 %v1847, 4294901760
        %v2140 = vsub.f32 %v1847, %v2139
        %2141 = vmatpush1.msra.mxu0 %v2140
        %2142 = vmatprep.subr.mxu0 0.0
        %v2143 = vand.u32 %v1848, 4294901760
        %v2144 = vsub.f32 %v1848, %v2143
        %2145 = vmatpush1.msra.mxu0 %v2144
        %2146 = vmatprep.subr.mxu0 0.0
        %v2147 = vand.u32 %v1849, 4294901760
        %v2148 = vsub.f32 %v1849, %v2147
        %2149 = vmatpush1.msra.mxu0 %v2148
        %2150 = vmatprep.subr.mxu0 0.0
        %v2151 = vand.u32 %v1850, 4294901760
        %v2152 = vsub.f32 %v1850, %v2151
        %2153 = vmatpush1.msra.mxu0 %v2152
        %2154 = vmatprep.subr.mxu0 0.0
        %v2155 = vand.u32 %v1851, 4294901760
        %v2156 = vsub.f32 %v1851, %v2155
        %2157 = vmatpush1.msra.mxu0 %v2156
        %2158 = vmatprep.subr.mxu0 0.0
        %2159 = vmatpush1.msra.mxu0 0.0
        %2160 = vmatprep.subr.mxu0 0.0
        %2161 = vmatpush1.msra.mxu0 0.0
        %2162 = vmatprep.subr.mxu0 0.0
        %2163 = vmatpush1.msra.mxu0 0.0
        %2164 = vmatprep.subr.mxu0 0.0
        %2165 = vmatpush1.msra.mxu0 0.0
        %2166 = vmatprep.subr.mxu0 0.0
        %2167 = vmatpush1.msra.mxu0 0.0
        %2168 = vmatprep.subr.mxu0 0.0
        %2169 = vmatpush1.msra.mxu0 0.0
        %2170 = vmatprep.subr.mxu0 0.0
        %2171 = vmatpush1.msra.mxu0 0.0
        %2172 = vmatprep.subr.mxu0 0.0
        %2173 = vmatpush1.msra.mxu0 0.0
        %2174 = vmatprep.subr.mxu0 0.0
        %2175 = vmatpush1.msra.mxu0 0.0
        %2176 = vmatprep.subr.mxu0 0.0
        %2177 = vmatpush1.msra.mxu0 0.0
        %2178 = vmatprep.subr.mxu0 0.0
        %2179 = vmatpush1.msra.mxu0 0.0
        %2180 = vmatprep.subr.mxu0 0.0
        %2181 = vmatpush1.msra.mxu0 0.0
        %2182 = vmatprep.subr.mxu0 0.0
        %2183 = vmatpush1.msra.mxu0 0.0
        %2184 = vmatprep.subr.mxu0 0.0
        %2185 = vmatpush1.msra.mxu0 0.0
        %2186 = vmatprep.subr.mxu0 0.0
        %2187 = vmatpush1.msra.mxu0 0.0
        %2188 = vmatprep.subr.mxu0 0.0
        %2189 = vmatpush1.msra.mxu0 0.0
        %2190 = vmatprep.mubr.f32.mxu0 0.0
        %v2191 = vand.u32 %v1192, 4294901760
        %v2192 = vsub.f32 %v1192, %v2191
        %2193 = vmatmul.mubr.f32.gmra.mrb[0].mxu0 %v2192
        %v2194 = vpop.f32.mrb[0].mxu0
        %v2195 = vadd.f32 %v2091, %v2194
        %v2196 = vpop.f32.mrb[0].mxu0
        %2197 = vdwg.mxu0
        %2198 = vmatprep.subr.mxu0 0.0
        %v2199 = vand.u32 %v1836, 4294901760
        %2200 = vmatpush1.msra.mxu0 %v2199
        %2201 = vmatprep.subr.mxu0 0.0
        %v2202 = vand.u32 %v1837, 4294901760
        %2203 = vmatpush1.msra.mxu0 %v2202
        %2204 = vmatprep.subr.mxu0 0.0
        %v2205 = vand.u32 %v1838, 4294901760
        %2206 = vmatpush1.msra.mxu0 %v2205
        %2207 = vmatprep.subr.mxu0 0.0
        %v2208 = vand.u32 %v1839, 4294901760
        %2209 = vmatpush1.msra.mxu0 %v2208
        %2210 = vmatprep.subr.mxu0 0.0
        %v2211 = vand.u32 %v1840, 4294901760
        %2212 = vmatpush1.msra.mxu0 %v2211
        %2213 = vmatprep.subr.mxu0 0.0
        %v2214 = vand.u32 %v1841, 4294901760
        %2215 = vmatpush1.msra.mxu0 %v2214
        %2216 = vmatprep.subr.mxu0 0.0
        %v2217 = vand.u32 %v1842, 4294901760
        %2218 = vmatpush1.msra.mxu0 %v2217
        %2219 = vmatprep.subr.mxu0 0.0
        %v2220 = vand.u32 %v1843, 4294901760
        %2221 = vmatpush1.msra.mxu0 %v2220
        %2222 = vmatprep.subr.mxu0 0.0
        %v2223 = vand.u32 %v1844, 4294901760
        %2224 = vmatpush1.msra.mxu0 %v2223
        %2225 = vmatprep.subr.mxu0 0.0
        %v2226 = vand.u32 %v1845, 4294901760
        %2227 = vmatpush1.msra.mxu0 %v2226
        %2228 = vmatprep.subr.mxu0 0.0
        %v2229 = vand.u32 %v1846, 4294901760
        %2230 = vmatpush1.msra.mxu0 %v2229
        %2231 = vmatprep.subr.mxu0 0.0
        %v2232 = vand.u32 %v1847, 4294901760
        %2233 = vmatpush1.msra.mxu0 %v2232
        %2234 = vmatprep.subr.mxu0 0.0
        %v2235 = vand.u32 %v1848, 4294901760
        %2236 = vmatpush1.msra.mxu0 %v2235
        %2237 = vmatprep.subr.mxu0 0.0
        %v2238 = vand.u32 %v1849, 4294901760
        %2239 = vmatpush1.msra.mxu0 %v2238
        %2240 = vmatprep.subr.mxu0 0.0
        %v2241 = vand.u32 %v1850, 4294901760
        %2242 = vmatpush1.msra.mxu0 %v2241
        %2243 = vmatprep.subr.mxu0 0.0
        %v2244 = vand.u32 %v1851, 4294901760
        %2245 = vmatpush1.msra.mxu0 %v2244
        %2246 = vmatprep.subr.mxu0 0.0
        %2247 = vmatpush1.msra.mxu0 0.0
        %2248 = vmatprep.subr.mxu0 0.0
        %2249 = vmatpush1.msra.mxu0 0.0
        %2250 = vmatprep.subr.mxu0 0.0
        %2251 = vmatpush1.msra.mxu0 0.0
        %2252 = vmatprep.subr.mxu0 0.0
        %2253 = vmatpush1.msra.mxu0 0.0
        %2254 = vmatprep.subr.mxu0 0.0
        %2255 = vmatpush1.msra.mxu0 0.0
        %2256 = vmatprep.subr.mxu0 0.0
        %2257 = vmatpush1.msra.mxu0 0.0
        %2258 = vmatprep.subr.mxu0 0.0
        %2259 = vmatpush1.msra.mxu0 0.0
        %2260 = vmatprep.subr.mxu0 0.0
        %2261 = vmatpush1.msra.mxu0 0.0
        %2262 = vmatprep.subr.mxu0 0.0
        %2263 = vmatpush1.msra.mxu0 0.0
        %2264 = vmatprep.subr.mxu0 0.0
        %2265 = vmatpush1.msra.mxu0 0.0
        %2266 = vmatprep.subr.mxu0 0.0
        %2267 = vmatpush1.msra.mxu0 0.0
        %2268 = vmatprep.subr.mxu0 0.0
        %2269 = vmatpush1.msra.mxu0 0.0
        %2270 = vmatprep.subr.mxu0 0.0
        %2271 = vmatpush1.msra.mxu0 0.0
        %2272 = vmatprep.subr.mxu0 0.0
        %2273 = vmatpush1.msra.mxu0 0.0
        %2274 = vmatprep.subr.mxu0 0.0
        %2275 = vmatpush1.msra.mxu0 0.0
        %2276 = vmatprep.subr.mxu0 0.0
        %2277 = vmatpush1.msra.mxu0 0.0
        %2278 = vmatprep.mubr.f32.mxu0 0.0
        %v2279 = vand.u32 %v1192, 4294901760
        %v2280 = vsub.f32 %v1192, %v2279
        %v2281 = vand.u32 %v2280, 4294901760
        %2282 = vmatmul.mubr.f32.gmra.mrb[0].mxu0 %v2281
        %v2283 = vpop.f32.mrb[0].mxu0
        %v2284 = vadd.f32 %v2195, %v2283
        %v2285 = vpop.f32.mrb[0].mxu0
        %2286 = vdwg.mxu0
        %2287 = vmatprep.subr.mxu0 0.0
        %v2288 = vand.u32 %v1836, 4294901760
        %v2289 = vsub.f32 %v1836, %v2288
        %v2290 = vand.u32 %v2289, 4294901760
        %2291 = vmatpush1.msra.mxu0 %v2290
        %2292 = vmatprep.subr.mxu0 0.0
        %v2293 = vand.u32 %v1837, 4294901760
        %v2294 = vsub.f32 %v1837, %v2293
        %v2295 = vand.u32 %v2294, 4294901760
        %2296 = vmatpush1.msra.mxu0 %v2295
        %2297 = vmatprep.subr.mxu0 0.0
        %v2298 = vand.u32 %v1838, 4294901760
        %v2299 = vsub.f32 %v1838, %v2298
        %v2300 = vand.u32 %v2299, 4294901760
        %2301 = vmatpush1.msra.mxu0 %v2300
        %2302 = vmatprep.subr.mxu0 0.0
        %v2303 = vand.u32 %v1839, 4294901760
        %v2304 = vsub.f32 %v1839, %v2303
        %v2305 = vand.u32 %v2304, 4294901760
        %2306 = vmatpush1.msra.mxu0 %v2305
        %2307 = vmatprep.subr.mxu0 0.0
        %v2308 = vand.u32 %v1840, 4294901760
        %v2309 = vsub.f32 %v1840, %v2308
        %v2310 = vand.u32 %v2309, 4294901760
        %2311 = vmatpush1.msra.mxu0 %v2310
        %2312 = vmatprep.subr.mxu0 0.0
        %v2313 = vand.u32 %v1841, 4294901760
        %v2314 = vsub.f32 %v1841, %v2313
        %v2315 = vand.u32 %v2314, 4294901760
        %2316 = vmatpush1.msra.mxu0 %v2315
        %2317 = vmatprep.subr.mxu0 0.0
        %v2318 = vand.u32 %v1842, 4294901760
        %v2319 = vsub.f32 %v1842, %v2318
        %v2320 = vand.u32 %v2319, 4294901760
        %2321 = vmatpush1.msra.mxu0 %v2320
        %2322 = vmatprep.subr.mxu0 0.0
        %v2323 = vand.u32 %v1843, 4294901760
        %v2324 = vsub.f32 %v1843, %v2323
        %v2325 = vand.u32 %v2324, 4294901760
        %2326 = vmatpush1.msra.mxu0 %v2325
        %2327 = vmatprep.subr.mxu0 0.0
        %v2328 = vand.u32 %v1844, 4294901760
        %v2329 = vsub.f32 %v1844, %v2328
        %v2330 = vand.u32 %v2329, 4294901760
        %2331 = vmatpush1.msra.mxu0 %v2330
        %2332 = vmatprep.subr.mxu0 0.0
        %v2333 = vand.u32 %v1845, 4294901760
        %v2334 = vsub.f32 %v1845, %v2333
        %v2335 = vand.u32 %v2334, 4294901760
        %2336 = vmatpush1.msra.mxu0 %v2335
        %2337 = vmatprep.subr.mxu0 0.0
        %v2338 = vand.u32 %v1846, 4294901760
        %v2339 = vsub.f32 %v1846, %v2338
        %v2340 = vand.u32 %v2339, 4294901760
        %2341 = vmatpush1.msra.mxu0 %v2340
        %2342 = vmatprep.subr.mxu0 0.0
        %v2343 = vand.u32 %v1847, 4294901760
        %v2344 = vsub.f32 %v1847, %v2343
        %v2345 = vand.u32 %v2344, 4294901760
        %2346 = vmatpush1.msra.mxu0 %v2345
        %2347 = vmatprep.subr.mxu0 0.0
        %v2348 = vand.u32 %v1848, 4294901760
        %v2349 = vsub.f32 %v1848, %v2348
        %v2350 = vand.u32 %v2349, 4294901760
        %2351 = vmatpush1.msra.mxu0 %v2350
        %2352 = vmatprep.subr.mxu0 0.0
        %v2353 = vand.u32 %v1849, 4294901760
        %v2354 = vsub.f32 %v1849, %v2353
        %v2355 = vand.u32 %v2354, 4294901760
        %2356 = vmatpush1.msra.mxu0 %v2355
        %2357 = vmatprep.subr.mxu0 0.0
        %v2358 = vand.u32 %v1850, 4294901760
        %v2359 = vsub.f32 %v1850, %v2358
        %v2360 = vand.u32 %v2359, 4294901760
        %2361 = vmatpush1.msra.mxu0 %v2360
        %2362 = vmatprep.subr.mxu0 0.0
        %v2363 = vand.u32 %v1851, 4294901760
        %v2364 = vsub.f32 %v1851, %v2363
        %v2365 = vand.u32 %v2364, 4294901760
        %2366 = vmatpush1.msra.mxu0 %v2365
        %2367 = vmatprep.subr.mxu0 0.0
        %2368 = vmatpush1.msra.mxu0 0.0
        %2369 = vmatprep.subr.mxu0 0.0
        %2370 = vmatpush1.msra.mxu0 0.0
        %2371 = vmatprep.subr.mxu0 0.0
        %2372 = vmatpush1.msra.mxu0 0.0
        %2373 = vmatprep.subr.mxu0 0.0
        %2374 = vmatpush1.msra.mxu0 0.0
        %2375 = vmatprep.subr.mxu0 0.0
        %2376 = vmatpush1.msra.mxu0 0.0
        %2377 = vmatprep.subr.mxu0 0.0
        %2378 = vmatpush1.msra.mxu0 0.0
        %2379 = vmatprep.subr.mxu0 0.0
        %2380 = vmatpush1.msra.mxu0 0.0
        %2381 = vmatprep.subr.mxu0 0.0
        %2382 = vmatpush1.msra.mxu0 0.0
        %2383 = vmatprep.subr.mxu0 0.0
        %2384 = vmatpush1.msra.mxu0 0.0
        %2385 = vmatprep.subr.mxu0 0.0
        %2386 = vmatpush1.msra.mxu0 0.0
        %2387 = vmatprep.subr.mxu0 0.0
        %2388 = vmatpush1.msra.mxu0 0.0
        %2389 = vmatprep.subr.mxu0 0.0
        %2390 = vmatpush1.msra.mxu0 0.0
        %2391 = vmatprep.subr.mxu0 0.0
        %2392 = vmatpush1.msra.mxu0 0.0
        %2393 = vmatprep.subr.mxu0 0.0
        %2394 = vmatpush1.msra.mxu0 0.0
        %2395 = vmatprep.subr.mxu0 0.0
        %2396 = vmatpush1.msra.mxu0 0.0
        %2397 = vmatprep.subr.mxu0 0.0
        %2398 = vmatpush1.msra.mxu0 0.0
        %2399 = vmatprep.mubr.f32.mxu0 0.0
        %v2400 = vand.u32 %v1192, 4294901760
        %2401 = vmatmul.mubr.f32.gmra.mrb[0].mxu0 %v2400
        %v2402 = vpop.f32.mrb[0].mxu0
        %v2403 = vadd.f32 %v2284, %v2402
        %v2404 = vpop.f32.mrb[0].mxu0
        %2405 = vdwg.mxu0
        %2406 = vmatprep.subr.mxu0 0.0
        %v2407 = vand.u32 %v1836, 4294901760
        %2408 = vmatpush1.msra.mxu0 %v2407
        %2409 = vmatprep.subr.mxu0 0.0
        %v2410 = vand.u32 %v1837, 4294901760
        %2411 = vmatpush1.msra.mxu0 %v2410
        %2412 = vmatprep.subr.mxu0 0.0
        %v2413 = vand.u32 %v1838, 4294901760
        %2414 = vmatpush1.msra.mxu0 %v2413
        %2415 = vmatprep.subr.mxu0 0.0
        %v2416 = vand.u32 %v1839, 4294901760
        %2417 = vmatpush1.msra.mxu0 %v2416
        %2418 = vmatprep.subr.mxu0 0.0
        %v2419 = vand.u32 %v1840, 4294901760
        %2420 = vmatpush1.msra.mxu0 %v2419
        %2421 = vmatprep.subr.mxu0 0.0
        %v2422 = vand.u32 %v1841, 4294901760
        %2423 = vmatpush1.msra.mxu0 %v2422
        %2424 = vmatprep.subr.mxu0 0.0
        %v2425 = vand.u32 %v1842, 4294901760
        %2426 = vmatpush1.msra.mxu0 %v2425
        %2427 = vmatprep.subr.mxu0 0.0
        %v2428 = vand.u32 %v1843, 4294901760
        %2429 = vmatpush1.msra.mxu0 %v2428
        %2430 = vmatprep.subr.mxu0 0.0
        %v2431 = vand.u32 %v1844, 4294901760
        %2432 = vmatpush1.msra.mxu0 %v2431
        %2433 = vmatprep.subr.mxu0 0.0
        %v2434 = vand.u32 %v1845, 4294901760
        %2435 = vmatpush1.msra.mxu0 %v2434
        %2436 = vmatprep.subr.mxu0 0.0
        %v2437 = vand.u32 %v1846, 4294901760
        %2438 = vmatpush1.msra.mxu0 %v2437
        %2439 = vmatprep.subr.mxu0 0.0
        %v2440 = vand.u32 %v1847, 4294901760
        %2441 = vmatpush1.msra.mxu0 %v2440
        %2442 = vmatprep.subr.mxu0 0.0
        %v2443 = vand.u32 %v1848, 4294901760
        %2444 = vmatpush1.msra.mxu0 %v2443
        %2445 = vmatprep.subr.mxu0 0.0
        %v2446 = vand.u32 %v1849, 4294901760
        %2447 = vmatpush1.msra.mxu0 %v2446
        %2448 = vmatprep.subr.mxu0 0.0
        %v2449 = vand.u32 %v1850, 4294901760
        %2450 = vmatpush1.msra.mxu0 %v2449
        %2451 = vmatprep.subr.mxu0 0.0
        %v2452 = vand.u32 %v1851, 4294901760
        %2453 = vmatpush1.msra.mxu0 %v2452
        %2454 = vmatprep.subr.mxu0 0.0
        %2455 = vmatpush1.msra.mxu0 0.0
        %2456 = vmatprep.subr.mxu0 0.0
        %2457 = vmatpush1.msra.mxu0 0.0
        %2458 = vmatprep.subr.mxu0 0.0
        %2459 = vmatpush1.msra.mxu0 0.0
        %2460 = vmatprep.subr.mxu0 0.0
        %2461 = vmatpush1.msra.mxu0 0.0
        %2462 = vmatprep.subr.mxu0 0.0
        %2463 = vmatpush1.msra.mxu0 0.0
        %2464 = vmatprep.subr.mxu0 0.0
        %2465 = vmatpush1.msra.mxu0 0.0
        %2466 = vmatprep.subr.mxu0 0.0
        %2467 = vmatpush1.msra.mxu0 0.0
        %2468 = vmatprep.subr.mxu0 0.0
        %2469 = vmatpush1.msra.mxu0 0.0
        %2470 = vmatprep.subr.mxu0 0.0
        %2471 = vmatpush1.msra.mxu0 0.0
        %2472 = vmatprep.subr.mxu0 0.0
        %2473 = vmatpush1.msra.mxu0 0.0
        %2474 = vmatprep.subr.mxu0 0.0
        %2475 = vmatpush1.msra.mxu0 0.0
        %2476 = vmatprep.subr.mxu0 0.0
        %2477 = vmatpush1.msra.mxu0 0.0
        %2478 = vmatprep.subr.mxu0 0.0
        %2479 = vmatpush1.msra.mxu0 0.0
        %2480 = vmatprep.subr.mxu0 0.0
        %2481 = vmatpush1.msra.mxu0 0.0
        %2482 = vmatprep.subr.mxu0 0.0
        %2483 = vmatpush1.msra.mxu0 0.0
        %2484 = vmatprep.subr.mxu0 0.0
        %2485 = vmatpush1.msra.mxu0 0.0
        %2486 = vmatprep.mubr.f32.mxu0 0.0
        %v2487 = vand.u32 %v1192, 4294901760
        %2488 = vmatmul.mubr.f32.gmra.mrb[0].mxu0 %v2487
        %v2489 = vpop.f32.mrb[0].mxu0
        %v2490 = vadd.f32 %v2403, %v2489
        %v2491 = vpop.f32.mrb[0].mxu0
        %2492 = vdwg.mxu0
        %v2493 = vmax.f32 %v1832, %v2490
        %vm2494 = vcmask 64512
        %2495 = vst.msk [vmem:[%s282] sm:$0xff] %vm2494, %v2493
        %2497 = vrot.lane.b32.xlu0 %v2493, 120
        %v2498 = vpop.permute.xlu0 %2497
        %s2500 = scalar_lea.vmem %s282, 8 [#allocation6]
        %2501 = vst.msk [vmem:[%s2500] sm:$0xff] %vm2494, %v2498
        %2502 = vrot.lane.b32.xlu0 %v2493, 112
        %v2503 = vpop.permute.xlu0 %2502
        %s2505 = scalar_lea.vmem %s282, 16 [#allocation6]
        %2506 = vst.msk [vmem:[%s2505] sm:$0xff] %vm2494, %v2503
        %2507 = vrot.lane.b32.xlu0 %v2493, 104
        %v2508 = vpop.permute.xlu0 %2507
        %s2510 = scalar_lea.vmem %s282, 24 [#allocation6]
        %2511 = vst.msk [vmem:[%s2510] sm:$0xff] %vm2494, %v2508
        %2512 = vrot.lane.b32.xlu0 %v2493, 96
        %v2513 = vpop.permute.xlu0 %2512
        %s2515 = scalar_lea.vmem %s282, 32 [#allocation6]
        %2516 = vst.msk [vmem:[%s2515] sm:$0xff] %vm2494, %v2513
        %2517 = vrot.lane.b32.xlu0 %v2493, 88
        %v2518 = vpop.permute.xlu0 %2517
        %s2520 = scalar_lea.vmem %s282, 40 [#allocation6]
        %2521 = vst.msk [vmem:[%s2520] sm:$0xff] %vm2494, %v2518
        %2522 = vrot.lane.b32.xlu0 %v2493, 80
        %v2523 = vpop.permute.xlu0 %2522
        %s2525 = scalar_lea.vmem %s282, 48 [#allocation6]
        %2526 = vst.msk [vmem:[%s2525] sm:$0xff] %vm2494, %v2523
        %2527 = vrot.lane.b32.xlu0 %v2493, 72
        %v2528 = vpop.permute.xlu0 %2527
        %s2530 = scalar_lea.vmem %s282, 56 [#allocation6]
        %2531 = vst.msk [vmem:[%s2530] sm:$0xff] %vm2494, %v2528
        %s2532 = sand.u32 %s164, 1
        %s2533 = scalar_lea.sflag [#allocation5], %s2532
        %s2534 = sand.u32 %s164, 1
        %s2535 = smul.addr %s2534, 128
        %s2536 = scalar_lea.vmem [#allocation4], %s2535
        %s2537 = sand.u32 %s190, 1
        %s2538 = scalar_lea.sflag [#allocation7], %s2537
        %s2539 = sand.u32 %s190, 1
        %s2540 = smul.addr %s2539, 64
        %s2541 = scalar_lea.vmem [#allocation6], %s2540
        // Predicated region
        $region45: #{encoder_forward.1} parent=43 // pred_check
          %p2542 = pneg %p174
        $region46: #{encoder_forward.1} parent=43 // pred_check_branch
          %2544 = sbr.rel (%p2542) target = $region48
        $region47: #{encoder_forward.1} parent=43 // pred_region
          %s2546 = ssub.s32 2048, 2048
          %2547 = vsyncadd %s2533, %s2546
          %s2548 = smul.addr %s25, 16
          %s2549 = smul.addr %s2548, 128
          %s2550 = scalar_lea.hbm %s6, %s2549
          %s2551 = sshll.u32 %s2536, 4
          %s2552 = int_to_ptr.vmem [resolvable:$true] %s2551
          %2557 = dma.vmem_to_hbm [thread:$0]  %s2552, 2048, %s2550, %s2533, 128, 128, 8
        $region48: #{encoder_forward.1} parent=43 // pred_fallthru
          _
        // Predicated region
        $region49: #{encoder_forward.1} parent=43 // pred_check
          %p2558 = pneg %p200
        $region50: #{encoder_forward.1} parent=43 // pred_check_branch
          %2560 = sbr.rel (%p2558) target = $region52
        $region51: #{encoder_forward.1} parent=43 // pred_region
          %s2562 = ssub.s32 1024, 1024
          %2563 = vsyncadd %s2538, %s2562
          %s2564 = smul.addr %s25, 8
          %s2565 = smul.addr %s2564, 128
          %s2566 = scalar_lea.hbm %s7, %s2565
          %s2567 = sshll.u32 %s2541, 4
          %s2568 = int_to_ptr.vmem [resolvable:$true] %s2567
          %2573 = dma.vmem_to_hbm [thread:$0]  %s2568, 1024, %s2566, %s2538, 128, 128, 8
        $region52: #{encoder_forward.1} parent=43 // pred_fallthru
          _
      $region44: #{encoder_forward.1} parent=5 // pred_fallthru
        _
      %p2574 = scmp.le.s32.totalorder 2, %s20
      // Predicated region
      $region53: #{encoder_forward.1} parent=5 // pred_check
        %p2575 = pneg %p2574
      $region54: #{encoder_forward.1} parent=5 // pred_check_branch
        %2577 = sbr.rel (%p2575) target = $region56
      $region55: #{encoder_forward.1} parent=5 // pred_region
        %s2578 = ssub.s32 %s20, 2
        // Predicated region
        $region57: #{encoder_forward.1} parent=55 // pred_check
          %p2579 = pneg %p180
        $region58: #{encoder_forward.1} parent=55 // pred_check_branch
          %2581 = sbr.rel (%p2579) target = $region60
        $region59: #{encoder_forward.1} parent=55 // pred_region
          %s2582 = sand.u32 %s165, 1
          %s2583 = scalar_lea.sflag [#allocation5], %s2582
          %s2584 = sand.u32 %s165, 1
          %s2585 = smul.addr %s2584, 128
          %s2586 = scalar_lea.vmem [#allocation4], %s2585
          %2587 = dma.done %s2583, 2048
        $region60: #{encoder_forward.1} parent=55 // pred_fallthru
          _
        // Predicated region
        $region61: #{encoder_forward.1} parent=55 // pred_check
          %p2588 = pneg %p206
        $region62: #{encoder_forward.1} parent=55 // pred_check_branch
          %2590 = sbr.rel (%p2588) target = $region64
        $region63: #{encoder_forward.1} parent=55 // pred_region
          %s2591 = sand.u32 %s191, 1
          %s2592 = scalar_lea.sflag [#allocation7], %s2591
          %s2593 = sand.u32 %s191, 1
          %s2594 = smul.addr %s2593, 64
          %s2595 = scalar_lea.vmem [#allocation6], %s2594
          %2596 = dma.done %s2592, 1024
        $region64: #{encoder_forward.1} parent=55 // pred_fallthru
          _
      $region56: #{encoder_forward.1} parent=5 // pred_fallthru
        _
    $region6: #{encoder_forward.1} parent=1 // loop_footer
      %s24 = sadd.s32 1, %s20
    $region7: #{encoder_forward.1} parent=1 // loop_footer_branch
      %19 = sbr.rel target = $region3
    $region8: #{encoder_forward.1} parent=1 // loop_exit
      _
    %2597 = vsyncpa [#allocation5], 1
    %s2598 = scalar_lea.sflag [#allocation5], 1
    %2599 = vsyncpa %s2598, 1
    %2600 = vsyncpa [#allocation7], 1
    %s2601 = scalar_lea.sflag [#allocation7], 1
    %2602 = vsyncpa %s2601, 1

</llo_original>
